<compile_context>
chip_gen: v6e
topology: v6e:2x2x1
jax: 0.10.0
libtpu: 0.0.40
codegen_flags: <defaults>
</compile_context>

<pallas_src>
import functools
import math

import jax
import jax.numpy as jnp
import numpy as np
from jax import lax
from jax.experimental import pallas as pl
from jax.experimental.pallas import tpu as pltpu

B_PAD = 8       # sublane tile
LANE = 128      # lane tile


def _pad_to(a, shape):
    """Zero-pad array `a` up to `shape` (trailing pads only)."""
    pads = [(0, s - d) for d, s in zip(a.shape, shape)]
    return jnp.pad(a, pads)


def _make_rnn_kernel(n_layers, T, H_pad):
    """Build the Pallas kernel body for fixed static sizes (padded dims)."""

    def kernel(*refs):
        # Inputs : x_flat (T*B_PAD, I_pad), h0 (n_layers, B_PAD, H_pad),
        #          per layer: w_ih_T (K_pad, H_pad), w_hh_T (H_pad, H_pad),
        #                     bias (1, H_pad),
        #          fc_w_T (H_pad, O_pad), fc_b (1, O_pad)
        # Outputs: out (T*B_PAD, O_pad) [time-major rows],
        #          hidden_out (n_layers, B_PAD, H_pad)
        # Scratch: buf (T*B_PAD, H_pad) f32 -- holds the input projection, then
        #          is overwritten in place with the layer's hidden sequence.
        x_ref = refs[0]
        h0_ref = refs[1]
        idx = 2
        layer_refs = []
        for _ in range(n_layers):
            layer_refs.append(refs[idx:idx + 3])
            idx += 3
        fc_w_ref = refs[idx]
        fc_b_ref = refs[idx + 1]
        out_ref = refs[idx + 2]
        hid_ref = refs[idx + 3]
        buf_ref = refs[idx + 4]

        for l in range(n_layers):
            w_ih_T_ref, w_hh_T_ref, bias_ref = layer_refs[l]

            # One throughput-friendly matmul for all timesteps of this layer:
            # (T*B_PAD, K_pad) @ (K_pad, H_pad) + bias, off the serial chain.
            # layer_in is loaded as a value BEFORE buf_ref is overwritten, so
            # the in-place reuse of the single scratch buffer is safe.
            layer_in = x_ref[...] if l == 0 else buf_ref[...]
            buf_ref[...] = (
                jnp.dot(layer_in, w_ih_T_ref[...],
                        preferred_element_type=jnp.float32)
                + bias_ref[...]
            )

            w_hh_T = w_hh_T_ref[...]                      # hoisted weight load

            def step(t, h):
                # Aligned (8, H_pad) tile per step: unmasked vld/vst.
                r = pl.multiple_of(t * B_PAD, B_PAD)
                # Read the projection rows first, then overwrite them with h.
                h = jnp.tanh(
                    jnp.dot(h, w_hh_T, preferred_element_type=jnp.float32)
                    + buf_ref[pl.ds(r, B_PAD), :]
                )
                buf_ref[pl.ds(r, B_PAD), :] = h
                return h

            h_last = lax.fori_loop(0, T, step, h0_ref[l],
                                   unroll=min(T, 8))
            hid_ref[l] = h_last

        # Final Linear over every (time, batch) position; buf_ref already holds
        # the flat (T*B_PAD, H_pad) hidden slab and the output is lane-dense
        # (O padded to 128) -> no masked partial stores.
        out_ref[...] = (
            jnp.dot(buf_ref[...], fc_w_ref[...],
                    preferred_element_type=jnp.float32)
            + fc_b_ref[...]
        )

    return kernel


def rnn_forward(x, hidden, rnn_params, fc_w, fc_b):
    """Pallas wrapper. rnn_params: list of (w_ih, w_hh, b_ih, b_hh) per layer
    in PyTorch layout (w_ih: (H, in_dim), w_hh: (H, H), biases: (H,)).
    Returns (output (B*T, O) in PyTorch batch_first order, hidden (n_layers, B, H))."""
    B, T, I = x.shape
    n_layers, _, H = hidden.shape
    O = fc_w.shape[0]

    assert B <= B_PAD, "this small-shape kernel keeps batch within one sublane tile"
    H_pad = pl.cdiv(H, LANE) * LANE
    I_pad = pl.cdiv(I, LANE) * LANE
    O_pad = pl.cdiv(O, LANE) * LANE

    # Glue (parameter / layout prep, outside the kernel): time-major + zero
    # padding to (8,128)-aligned tiles.  Padded weight rows/cols, biases and h0
    # lanes are exactly zero, so padded hidden lanes stay 0 through tanh.
    x_tm = jnp.transpose(x, (1, 0, 2))                                # (T, B, I)
    x_flat = _pad_to(x_tm, (T, B_PAD, I_pad)).reshape(T * B_PAD, I_pad)
    h0_pad = _pad_to(hidden, (n_layers, B_PAD, H_pad))

    flat_params = []
    for l, (w_ih, w_hh, b_ih, b_hh) in enumerate(rnn_params):
        k_pad = I_pad if l == 0 else H_pad
        flat_params += [
            _pad_to(w_ih.T, (k_pad, H_pad)),                          # (K_pad, H_pad)
            _pad_to(w_hh.T, (H_pad, H_pad)),                          # (H_pad, H_pad)
            _pad_to((b_ih + b_hh).reshape(1, H), (1, H_pad)),         # (1, H_pad)
        ]
    fc_w_T = _pad_to(fc_w.T, (H_pad, O_pad))                          # (H_pad, O_pad)
    fc_b_row = _pad_to(fc_b.reshape(1, O), (1, O_pad))                # (1, O_pad)

    n_inputs = 2 + 3 * n_layers + 2
    vmem_spec = pl.BlockSpec(memory_space=pltpu.MemorySpace.VMEM)

    kernel = _make_rnn_kernel(n_layers, T, H_pad)
    out_tb, hid_pad = pl.pallas_call(
        kernel,
        out_shape=(
            jax.ShapeDtypeStruct((T * B_PAD, O_pad), jnp.float32),
            jax.ShapeDtypeStruct((n_layers, B_PAD, H_pad), jnp.float32),
        ),
        in_specs=[vmem_spec] * n_inputs,
        out_specs=(vmem_spec, vmem_spec),
        scratch_shapes=[
            # single shared buffer: input projection, then hidden sequence
            pltpu.VMEM((T * B_PAD, H_pad), jnp.float32),
        ],
        compiler_params=pltpu.CompilerParams(
            vmem_limit_bytes=32 * 1024 * 1024,   # fits v5e/v6e/v7x scoped VMEM
        ),
    )(x_flat, h0_pad, *flat_params, fc_w_T, fc_b_row)

    # Strip padding and reorder time-major rows (t, b) back to PyTorch's
    # batch_first view ordering (b*T + t). Tiny ops done in the wrapper.
    out = out_tb.reshape(T, B_PAD, O_pad)[:, :B, :O]
    out = jnp.transpose(out, (1, 0, 2)).reshape(B * T, O)
    hid = hid_pad[:, :B, :H]
    return out, hid


def rnn_reference(x, hidden, rnn_params, fc_w, fc_b):
    """Pure-JAX reference matching PyTorch nn.RNN(batch_first=True) + nn.Linear."""
    B, T, _ = x.shape
    seq = x
    finals = []
    for l, (w_ih, w_hh, b_ih, b_hh) in enumerate(rnn_params):
        h = hidden[l]
        outs = []
        for t in range(T):
            h = jnp.tanh(seq[:, t, :] @ w_ih.T + b_ih + h @ w_hh.T + b_hh)
            outs.append(h)
        seq = jnp.stack(outs, axis=1)
        finals.append(h)
    out = seq.reshape(-1, seq.shape[-1]) @ fc_w.T + fc_b
    return out, jnp.stack(finals, axis=0)


if __name__ == "__main__":
    # Small, forward-consistent sizes.
    input_size, output_size, hidden_dim, n_layers = 4, 1, 32, 2
    batch, seq_len = 2, 8

    key = jax.random.PRNGKey(0)
    keys = jax.random.split(key, 4 * n_layers + 4)

    # Deterministic PyTorch-style init: U(-1/sqrt(H), 1/sqrt(H)) for the RNN,
    # U(-1/sqrt(in_features), 1/sqrt(in_features)) for the Linear.
    k_rnn = 1.0 / math.sqrt(hidden_dim)
    rnn_params = []
    ki = 0
    for l in range(n_layers):
        in_dim = input_size if l == 0 else hidden_dim
        w_ih = jax.random.uniform(keys[ki + 0], (hidden_dim, in_dim),
                                  jnp.float32, -k_rnn, k_rnn)
        w_hh = jax.random.uniform(keys[ki + 1], (hidden_dim, hidden_dim),
                                  jnp.float32, -k_rnn, k_rnn)
        b_ih = jax.random.uniform(keys[ki + 2], (hidden_dim,),
                                  jnp.float32, -k_rnn, k_rnn)
        b_hh = jax.random.uniform(keys[ki + 3], (hidden_dim,),
                                  jnp.float32, -k_rnn, k_rnn)
        rnn_params.append((w_ih, w_hh, b_ih, b_hh))
        ki += 4

    k_fc = 1.0 / math.sqrt(hidden_dim)
    fc_w = jax.random.uniform(keys[ki + 0], (output_size, hidden_dim),
                              jnp.float32, -k_fc, k_fc)
    fc_b = jax.random.uniform(keys[ki + 1], (output_size,),
                              jnp.float32, -k_fc, k_fc)

    x = jax.random.normal(keys[ki + 2], (batch, seq_len, input_size), jnp.float32)
    hidden0 = jax.random.normal(keys[ki + 3], (n_layers, batch, hidden_dim),
                                jnp.float32)

    out, hid = rnn_forward(x, hidden0, rnn_params, fc_w, fc_b)
    out = jax.block_until_ready(out)
    hid = jax.block_until_ready(hid)

    out_ref, hid_ref = rnn_reference(x, hidden0, rnn_params, fc_w, fc_b)
    np.testing.assert_allclose(np.asarray(out), np.asarray(out_ref),
                               rtol=1e-5, atol=1e-5)
    np.testing.assert_allclose(np.asarray(hid), np.asarray(hid_ref),
                               rtol=1e-5, atol=1e-5)

    assert out.shape == (batch * seq_len, output_size)
    assert hid.shape == (n_layers, batch, hidden_dim)
    print("KERNEL_OK")
</pallas_src>

<mosaic_0001>
module attributes {stable_mosaic.version = 11 : i64} {
  func.func @kernel(%arg0: memref<64x128xf32, #tpu.memory_space<vmem>>, %arg1: memref<2x8x128xf32, #tpu.memory_space<vmem>>, %arg2: memref<128x128xf32, #tpu.memory_space<vmem>>, %arg3: memref<128x128xf32, #tpu.memory_space<vmem>>, %arg4: memref<1x128xf32, #tpu.memory_space<vmem>>, %arg5: memref<128x128xf32, #tpu.memory_space<vmem>>, %arg6: memref<128x128xf32, #tpu.memory_space<vmem>>, %arg7: memref<1x128xf32, #tpu.memory_space<vmem>>, %arg8: memref<128x128xf32, #tpu.memory_space<vmem>>, %arg9: memref<1x128xf32, #tpu.memory_space<vmem>>, %arg10: memref<64x128xf32, #tpu.memory_space<vmem>>, %arg11: memref<2x8x128xf32, #tpu.memory_space<vmem>>, %arg12: memref<64x128xf32, #tpu.memory_space<vmem>>) attributes {dimension_semantics = [], scalar_prefetch = 0 : i64, scratch_operands = 1 : i64, tpu.core_type = #tpu.core_type<tc>} {
    %c0 = arith.constant 0 : index
    %c0_0 = arith.constant 0 : index
    %0 = vector.load %arg0[%c0, %c0_0] : memref<64x128xf32, #tpu.memory_space<vmem>>, vector<64x128xf32>
    %c0_1 = arith.constant 0 : index
    %c0_2 = arith.constant 0 : index
    %1 = vector.load %arg2[%c0_1, %c0_2] : memref<128x128xf32, #tpu.memory_space<vmem>>, vector<128x128xf32>
    %cst = arith.constant dense<0.000000e+00> : vector<64x128xf32>
    %2 = tpu.matmul %0, %1, %cst {dimension_numbers = #tpu.dot_dimension_numbers<[1], [0], [0], [1], [0, 0, 1, 1], [], []>} : vector<64x128xf32>, vector<128x128xf32>, vector<64x128xf32> -> vector<64x128xf32>
    %c0_3 = arith.constant 0 : index
    %c0_4 = arith.constant 0 : index
    %3 = vector.load %arg4[%c0_3, %c0_4] : memref<1x128xf32, #tpu.memory_space<vmem>>, vector<1x128xf32>
    %4 = vector.broadcast %3 : vector<1x128xf32> to vector<64x128xf32>
    %5 = arith.addf %2, %4 : vector<64x128xf32>
    %c0_5 = arith.constant 0 : index
    %c0_6 = arith.constant 0 : index
    %6 = vector.load %arg12[%c0_5, %c0_6] : memref<64x128xf32, #tpu.memory_space<vmem>>, vector<64x128xf32>
    tpu.vector_store %arg12[%c0_5, %c0_6], %5 {strides = array<i32>} : memref<64x128xf32, #tpu.memory_space<vmem>>, vector<64x128xf32>,
    %c0_7 = arith.constant 0 : index
    %c0_8 = arith.constant 0 : index
    %7 = vector.load %arg3[%c0_7, %c0_8] : memref<128x128xf32, #tpu.memory_space<vmem>>, vector<128x128xf32>
    %c0_9 = arith.constant 0 : index
    %c0_10 = arith.constant 0 : index
    %c0_11 = arith.constant 0 : index
    %8 = vector.load %arg1[%c0_9, %c0_10, %c0_11] : memref<2x8x128xf32, #tpu.memory_space<vmem>>, vector<1x8x128xf32>
    %9 = vector.shape_cast %8 : vector<1x8x128xf32> to vector<8x128xf32>
    %c0_i32 = arith.constant 0 : i32
    %c8_i32 = arith.constant 8 : i32
    %10 = arith.muli %c0_i32, %c8_i32 : i32
    %11 = tpu.assume_multiple %10, 8 : i32
    %cst_12 = arith.constant dense<0.000000e+00> : vector<8x128xf32>
    %12 = tpu.matmul %9, %7, %cst_12 {dimension_numbers = #tpu.dot_dimension_numbers<[1], [0], [0], [1], [0, 0, 1, 1], [], []>} : vector<8x128xf32>, vector<128x128xf32>, vector<8x128xf32> -> vector<8x128xf32>
    %13 = arith.index_cast %11 : i32 to index
    %c0_13 = arith.constant 0 : index
    %14 = vector.load %arg12[%13, %c0_13] : memref<64x128xf32, #tpu.memory_space<vmem>>, vector<8x128xf32>
    %15 = arith.addf %12, %14 : vector<8x128xf32>
    %16 = math.tanh %15 : vector<8x128xf32>
    %17 = arith.index_cast %11 : i32 to index
    %c0_14 = arith.constant 0 : index
    %18 = vector.load %arg12[%17, %c0_14] : memref<64x128xf32, #tpu.memory_space<vmem>>, vector<8x128xf32>
    tpu.vector_store %arg12[%17, %c0_14], %16 {strides = array<i32>} : memref<64x128xf32, #tpu.memory_space<vmem>>, vector<8x128xf32>,
    %c1_i32 = arith.constant 1 : i32
    %c8_i32_15 = arith.constant 8 : i32
    %19 = arith.muli %c1_i32, %c8_i32_15 : i32
    %20 = tpu.assume_multiple %19, 8 : i32
    %cst_16 = arith.constant dense<0.000000e+00> : vector<8x128xf32>
    %21 = tpu.matmul %16, %7, %cst_16 {dimension_numbers = #tpu.dot_dimension_numbers<[1], [0], [0], [1], [0, 0, 1, 1], [], []>} : vector<8x128xf32>, vector<128x128xf32>, vector<8x128xf32> -> vector<8x128xf32>
    %22 = arith.index_cast %20 : i32 to index
    %c0_17 = arith.constant 0 : index
    %23 = vector.load %arg12[%22, %c0_17] : memref<64x128xf32, #tpu.memory_space<vmem>>, vector<8x128xf32>
    %24 = arith.addf %21, %23 : vector<8x128xf32>
    %25 = math.tanh %24 : vector<8x128xf32>
    %26 = arith.index_cast %20 : i32 to index
    %c0_18 = arith.constant 0 : index
    %27 = vector.load %arg12[%26, %c0_18] : memref<64x128xf32, #tpu.memory_space<vmem>>, vector<8x128xf32>
    tpu.vector_store %arg12[%26, %c0_18], %25 {strides = array<i32>} : memref<64x128xf32, #tpu.memory_space<vmem>>, vector<8x128xf32>,
    %c2_i32 = arith.constant 2 : i32
    %c8_i32_19 = arith.constant 8 : i32
    %28 = arith.muli %c2_i32, %c8_i32_19 : i32
    %29 = tpu.assume_multiple %28, 8 : i32
    %cst_20 = arith.constant dense<0.000000e+00> : vector<8x128xf32>
    %30 = tpu.matmul %25, %7, %cst_20 {dimension_numbers = #tpu.dot_dimension_numbers<[1], [0], [0], [1], [0, 0, 1, 1], [], []>} : vector<8x128xf32>, vector<128x128xf32>, vector<8x128xf32> -> vector<8x128xf32>
    %31 = arith.index_cast %29 : i32 to index
    %c0_21 = arith.constant 0 : index
    %32 = vector.load %arg12[%31, %c0_21] : memref<64x128xf32, #tpu.memory_space<vmem>>, vector<8x128xf32>
    %33 = arith.addf %30, %32 : vector<8x128xf32>
    %34 = math.tanh %33 : vector<8x128xf32>
    %35 = arith.index_cast %29 : i32 to index
    %c0_22 = arith.constant 0 : index
    %36 = vector.load %arg12[%35, %c0_22] : memref<64x128xf32, #tpu.memory_space<vmem>>, vector<8x128xf32>
    tpu.vector_store %arg12[%35, %c0_22], %34 {strides = array<i32>} : memref<64x128xf32, #tpu.memory_space<vmem>>, vector<8x128xf32>,
    %c3_i32 = arith.constant 3 : i32
    %c8_i32_23 = arith.constant 8 : i32
    %37 = arith.muli %c3_i32, %c8_i32_23 : i32
    %38 = tpu.assume_multiple %37, 8 : i32
    %cst_24 = arith.constant dense<0.000000e+00> : vector<8x128xf32>
    %39 = tpu.matmul %34, %7, %cst_24 {dimension_numbers = #tpu.dot_dimension_numbers<[1], [0], [0], [1], [0, 0, 1, 1], [], []>} : vector<8x128xf32>, vector<128x128xf32>, vector<8x128xf32> -> vector<8x128xf32>
    %40 = arith.index_cast %38 : i32 to index
    %c0_25 = arith.constant 0 : index
    %41 = vector.load %arg12[%40, %c0_25] : memref<64x128xf32, #tpu.memory_space<vmem>>, vector<8x128xf32>
    %42 = arith.addf %39, %41 : vector<8x128xf32>
    %43 = math.tanh %42 : vector<8x128xf32>
    %44 = arith.index_cast %38 : i32 to index
    %c0_26 = arith.constant 0 : index
    %45 = vector.load %arg12[%44, %c0_26] : memref<64x128xf32, #tpu.memory_space<vmem>>, vector<8x128xf32>
    tpu.vector_store %arg12[%44, %c0_26], %43 {strides = array<i32>} : memref<64x128xf32, #tpu.memory_space<vmem>>, vector<8x128xf32>,
    %c4_i32 = arith.constant 4 : i32
    %c8_i32_27 = arith.constant 8 : i32
    %46 = arith.muli %c4_i32, %c8_i32_27 : i32
    %47 = tpu.assume_multiple %46, 8 : i32
    %cst_28 = arith.constant dense<0.000000e+00> : vector<8x128xf32>
    %48 = tpu.matmul %43, %7, %cst_28 {dimension_numbers = #tpu.dot_dimension_numbers<[1], [0], [0], [1], [0, 0, 1, 1], [], []>} : vector<8x128xf32>, vector<128x128xf32>, vector<8x128xf32> -> vector<8x128xf32>
    %49 = arith.index_cast %47 : i32 to index
    %c0_29 = arith.constant 0 : index
    %50 = vector.load %arg12[%49, %c0_29] : memref<64x128xf32, #tpu.memory_space<vmem>>, vector<8x128xf32>
    %51 = arith.addf %48, %50 : vector<8x128xf32>
    %52 = math.tanh %51 : vector<8x128xf32>
    %53 = arith.index_cast %47 : i32 to index
    %c0_30 = arith.constant 0 : index
    %54 = vector.load %arg12[%53, %c0_30] : memref<64x128xf32, #tpu.memory_space<vmem>>, vector<8x128xf32>
    tpu.vector_store %arg12[%53, %c0_30], %52 {strides = array<i32>} : memref<64x128xf32, #tpu.memory_space<vmem>>, vector<8x128xf32>,
    %c5_i32 = arith.constant 5 : i32
    %c8_i32_31 = arith.constant 8 : i32
    %55 = arith.muli %c5_i32, %c8_i32_31 : i32
    %56 = tpu.assume_multiple %55, 8 : i32
    %cst_32 = arith.constant dense<0.000000e+00> : vector<8x128xf32>
    %57 = tpu.matmul %52, %7, %cst_32 {dimension_numbers = #tpu.dot_dimension_numbers<[1], [0], [0], [1], [0, 0, 1, 1], [], []>} : vector<8x128xf32>, vector<128x128xf32>, vector<8x128xf32> -> vector<8x128xf32>
    %58 = arith.index_cast %56 : i32 to index
    %c0_33 = arith.constant 0 : index
    %59 = vector.load %arg12[%58, %c0_33] : memref<64x128xf32, #tpu.memory_space<vmem>>, vector<8x128xf32>
    %60 = arith.addf %57, %59 : vector<8x128xf32>
    %61 = math.tanh %60 : vector<8x128xf32>
    %62 = arith.index_cast %56 : i32 to index
    %c0_34 = arith.constant 0 : index
    %63 = vector.load %arg12[%62, %c0_34] : memref<64x128xf32, #tpu.memory_space<vmem>>, vector<8x128xf32>
    tpu.vector_store %arg12[%62, %c0_34], %61 {strides = array<i32>} : memref<64x128xf32, #tpu.memory_space<vmem>>, vector<8x128xf32>,
    %c6_i32 = arith.constant 6 : i32
    %c8_i32_35 = arith.constant 8 : i32
    %64 = arith.muli %c6_i32, %c8_i32_35 : i32
    %65 = tpu.assume_multiple %64, 8 : i32
    %cst_36 = arith.constant dense<0.000000e+00> : vector<8x128xf32>
    %66 = tpu.matmul %61, %7, %cst_36 {dimension_numbers = #tpu.dot_dimension_numbers<[1], [0], [0], [1], [0, 0, 1, 1], [], []>} : vector<8x128xf32>, vector<128x128xf32>, vector<8x128xf32> -> vector<8x128xf32>
    %67 = arith.index_cast %65 : i32 to index
    %c0_37 = arith.constant 0 : index
    %68 = vector.load %arg12[%67, %c0_37] : memref<64x128xf32, #tpu.memory_space<vmem>>, vector<8x128xf32>
    %69 = arith.addf %66, %68 : vector<8x128xf32>
    %70 = math.tanh %69 : vector<8x128xf32>
    %71 = arith.index_cast %65 : i32 to index
    %c0_38 = arith.constant 0 : index
    %72 = vector.load %arg12[%71, %c0_38] : memref<64x128xf32, #tpu.memory_space<vmem>>, vector<8x128xf32>
    tpu.vector_store %arg12[%71, %c0_38], %70 {strides = array<i32>} : memref<64x128xf32, #tpu.memory_space<vmem>>, vector<8x128xf32>,
    %c7_i32 = arith.constant 7 : i32
    %c8_i32_39 = arith.constant 8 : i32
    %73 = arith.muli %c7_i32, %c8_i32_39 : i32
    %74 = tpu.assume_multiple %73, 8 : i32
    %cst_40 = arith.constant dense<0.000000e+00> : vector<8x128xf32>
    %75 = tpu.matmul %70, %7, %cst_40 {dimension_numbers = #tpu.dot_dimension_numbers<[1], [0], [0], [1], [0, 0, 1, 1], [], []>} : vector<8x128xf32>, vector<128x128xf32>, vector<8x128xf32> -> vector<8x128xf32>
    %76 = arith.index_cast %74 : i32 to index
    %c0_41 = arith.constant 0 : index
    %77 = vector.load %arg12[%76, %c0_41] : memref<64x128xf32, #tpu.memory_space<vmem>>, vector<8x128xf32>
    %78 = arith.addf %75, %77 : vector<8x128xf32>
    %79 = math.tanh %78 : vector<8x128xf32>
    %80 = arith.index_cast %74 : i32 to index
    %c0_42 = arith.constant 0 : index
    %81 = vector.load %arg12[%80, %c0_42] : memref<64x128xf32, #tpu.memory_space<vmem>>, vector<8x128xf32>
    tpu.vector_store %arg12[%80, %c0_42], %79 {strides = array<i32>} : memref<64x128xf32, #tpu.memory_space<vmem>>, vector<8x128xf32>,
    %c8_i32_43 = arith.constant 8 : i32
    %c0_44 = arith.constant 0 : index
    %c0_45 = arith.constant 0 : index
    %c0_46 = arith.constant 0 : index
    %82 = vector.load %arg11[%c0_44, %c0_45, %c0_46] : memref<2x8x128xf32, #tpu.memory_space<vmem>>, vector<1x8x128xf32>
    %83 = vector.shape_cast %82 : vector<1x8x128xf32> to vector<8x128xf32>
    %84 = vector.shape_cast %79 : vector<8x128xf32> to vector<1x8x128xf32>
    tpu.vector_store %arg11[%c0_44, %c0_45, %c0_46], %84 {strides = array<i32>} : memref<2x8x128xf32, #tpu.memory_space<vmem>>, vector<1x8x128xf32>,
    %c0_47 = arith.constant 0 : index
    %c0_48 = arith.constant 0 : index
    %85 = vector.load %arg12[%c0_47, %c0_48] : memref<64x128xf32, #tpu.memory_space<vmem>>, vector<64x128xf32>
    %c0_49 = arith.constant 0 : index
    %c0_50 = arith.constant 0 : index
    %86 = vector.load %arg5[%c0_49, %c0_50] : memref<128x128xf32, #tpu.memory_space<vmem>>, vector<128x128xf32>
    %cst_51 = arith.constant dense<0.000000e+00> : vector<64x128xf32>
    %87 = tpu.matmul %85, %86, %cst_51 {dimension_numbers = #tpu.dot_dimension_numbers<[1], [0], [0], [1], [0, 0, 1, 1], [], []>} : vector<64x128xf32>, vector<128x128xf32>, vector<64x128xf32> -> vector<64x128xf32>
    %c0_52 = arith.constant 0 : index
    %c0_53 = arith.constant 0 : index
    %88 = vector.load %arg7[%c0_52, %c0_53] : memref<1x128xf32, #tpu.memory_space<vmem>>, vector<1x128xf32>
    %89 = vector.broadcast %88 : vector<1x128xf32> to vector<64x128xf32>
    %90 = arith.addf %87, %89 : vector<64x128xf32>
    %c0_54 = arith.constant 0 : index
    %c0_55 = arith.constant 0 : index
    %91 = vector.load %arg12[%c0_54, %c0_55] : memref<64x128xf32, #tpu.memory_space<vmem>>, vector<64x128xf32>
    tpu.vector_store %arg12[%c0_54, %c0_55], %90 {strides = array<i32>} : memref<64x128xf32, #tpu.memory_space<vmem>>, vector<64x128xf32>,
    %c0_56 = arith.constant 0 : index
    %c0_57 = arith.constant 0 : index
    %92 = vector.load %arg6[%c0_56, %c0_57] : memref<128x128xf32, #tpu.memory_space<vmem>>, vector<128x128xf32>
    %c1 = arith.constant 1 : index
    %c0_58 = arith.constant 0 : index
    %c0_59 = arith.constant 0 : index
    %93 = vector.load %arg1[%c1, %c0_58, %c0_59] : memref<2x8x128xf32, #tpu.memory_space<vmem>>, vector<1x8x128xf32>
    %94 = vector.shape_cast %93 : vector<1x8x128xf32> to vector<8x128xf32>
    %c0_i32_60 = arith.constant 0 : i32
    %c8_i32_61 = arith.constant 8 : i32
    %95 = arith.muli %c0_i32_60, %c8_i32_61 : i32
    %96 = tpu.assume_multiple %95, 8 : i32
    %cst_62 = arith.constant dense<0.000000e+00> : vector<8x128xf32>
    %97 = tpu.matmul %94, %92, %cst_62 {dimension_numbers = #tpu.dot_dimension_numbers<[1], [0], [0], [1], [0, 0, 1, 1], [], []>} : vector<8x128xf32>, vector<128x128xf32>, vector<8x128xf32> -> vector<8x128xf32>
    %98 = arith.index_cast %96 : i32 to index
    %c0_63 = arith.constant 0 : index
    %99 = vector.load %arg12[%98, %c0_63] : memref<64x128xf32, #tpu.memory_space<vmem>>, vector<8x128xf32>
    %100 = arith.addf %97, %99 : vector<8x128xf32>
    %101 = math.tanh %100 : vector<8x128xf32>
    %102 = arith.index_cast %96 : i32 to index
    %c0_64 = arith.constant 0 : index
    %103 = vector.load %arg12[%102, %c0_64] : memref<64x128xf32, #tpu.memory_space<vmem>>, vector<8x128xf32>
    tpu.vector_store %arg12[%102, %c0_64], %101 {strides = array<i32>} : memref<64x128xf32, #tpu.memory_space<vmem>>, vector<8x128xf32>,
    %c1_i32_65 = arith.constant 1 : i32
    %c8_i32_66 = arith.constant 8 : i32
    %104 = arith.muli %c1_i32_65, %c8_i32_66 : i32
    %105 = tpu.assume_multiple %104, 8 : i32
    %cst_67 = arith.constant dense<0.000000e+00> : vector<8x128xf32>
    %106 = tpu.matmul %101, %92, %cst_67 {dimension_numbers = #tpu.dot_dimension_numbers<[1], [0], [0], [1], [0, 0, 1, 1], [], []>} : vector<8x128xf32>, vector<128x128xf32>, vector<8x128xf32> -> vector<8x128xf32>
    %107 = arith.index_cast %105 : i32 to index
    %c0_68 = arith.constant 0 : index
    %108 = vector.load %arg12[%107, %c0_68] : memref<64x128xf32, #tpu.memory_space<vmem>>, vector<8x128xf32>
    %109 = arith.addf %106, %108 : vector<8x128xf32>
    %110 = math.tanh %109 : vector<8x128xf32>
    %111 = arith.index_cast %105 : i32 to index
    %c0_69 = arith.constant 0 : index
    %112 = vector.load %arg12[%111, %c0_69] : memref<64x128xf32, #tpu.memory_space<vmem>>, vector<8x128xf32>
    tpu.vector_store %arg12[%111, %c0_69], %110 {strides = array<i32>} : memref<64x128xf32, #tpu.memory_space<vmem>>, vector<8x128xf32>,
    %c2_i32_70 = arith.constant 2 : i32
    %c8_i32_71 = arith.constant 8 : i32
    %113 = arith.muli %c2_i32_70, %c8_i32_71 : i32
    %114 = tpu.assume_multiple %113, 8 : i32
    %cst_72 = arith.constant dense<0.000000e+00> : vector<8x128xf32>
    %115 = tpu.matmul %110, %92, %cst_72 {dimension_numbers = #tpu.dot_dimension_numbers<[1], [0], [0], [1], [0, 0, 1, 1], [], []>} : vector<8x128xf32>, vector<128x128xf32>, vector<8x128xf32> -> vector<8x128xf32>
    %116 = arith.index_cast %114 : i32 to index
    %c0_73 = arith.constant 0 : index
    %117 = vector.load %arg12[%116, %c0_73] : memref<64x128xf32, #tpu.memory_space<vmem>>, vector<8x128xf32>
    %118 = arith.addf %115, %117 : vector<8x128xf32>
    %119 = math.tanh %118 : vector<8x128xf32>
    %120 = arith.index_cast %114 : i32 to index
    %c0_74 = arith.constant 0 : index
    %121 = vector.load %arg12[%120, %c0_74] : memref<64x128xf32, #tpu.memory_space<vmem>>, vector<8x128xf32>
    tpu.vector_store %arg12[%120, %c0_74], %119 {strides = array<i32>} : memref<64x128xf32, #tpu.memory_space<vmem>>, vector<8x128xf32>,
    %c3_i32_75 = arith.constant 3 : i32
    %c8_i32_76 = arith.constant 8 : i32
    %122 = arith.muli %c3_i32_75, %c8_i32_76 : i32
    %123 = tpu.assume_multiple %122, 8 : i32
    %cst_77 = arith.constant dense<0.000000e+00> : vector<8x128xf32>
    %124 = tpu.matmul %119, %92, %cst_77 {dimension_numbers = #tpu.dot_dimension_numbers<[1], [0], [0], [1], [0, 0, 1, 1], [], []>} : vector<8x128xf32>, vector<128x128xf32>, vector<8x128xf32> -> vector<8x128xf32>
    %125 = arith.index_cast %123 : i32 to index
    %c0_78 = arith.constant 0 : index
    %126 = vector.load %arg12[%125, %c0_78] : memref<64x128xf32, #tpu.memory_space<vmem>>, vector<8x128xf32>
    %127 = arith.addf %124, %126 : vector<8x128xf32>
    %128 = math.tanh %127 : vector<8x128xf32>
    %129 = arith.index_cast %123 : i32 to index
    %c0_79 = arith.constant 0 : index
    %130 = vector.load %arg12[%129, %c0_79] : memref<64x128xf32, #tpu.memory_space<vmem>>, vector<8x128xf32>
    tpu.vector_store %arg12[%129, %c0_79], %128 {strides = array<i32>} : memref<64x128xf32, #tpu.memory_space<vmem>>, vector<8x128xf32>,
    %c4_i32_80 = arith.constant 4 : i32
    %c8_i32_81 = arith.constant 8 : i32
    %131 = arith.muli %c4_i32_80, %c8_i32_81 : i32
    %132 = tpu.assume_multiple %131, 8 : i32
    %cst_82 = arith.constant dense<0.000000e+00> : vector<8x128xf32>
    %133 = tpu.matmul %128, %92, %cst_82 {dimension_numbers = #tpu.dot_dimension_numbers<[1], [0], [0], [1], [0, 0, 1, 1], [], []>} : vector<8x128xf32>, vector<128x128xf32>, vector<8x128xf32> -> vector<8x128xf32>
    %134 = arith.index_cast %132 : i32 to index
    %c0_83 = arith.constant 0 : index
    %135 = vector.load %arg12[%134, %c0_83] : memref<64x128xf32, #tpu.memory_space<vmem>>, vector<8x128xf32>
    %136 = arith.addf %133, %135 : vector<8x128xf32>
    %137 = math.tanh %136 : vector<8x128xf32>
    %138 = arith.index_cast %132 : i32 to index
    %c0_84 = arith.constant 0 : index
    %139 = vector.load %arg12[%138, %c0_84] : memref<64x128xf32, #tpu.memory_space<vmem>>, vector<8x128xf32>
    tpu.vector_store %arg12[%138, %c0_84], %137 {strides = array<i32>} : memref<64x128xf32, #tpu.memory_space<vmem>>, vector<8x128xf32>,
    %c5_i32_85 = arith.constant 5 : i32
    %c8_i32_86 = arith.constant 8 : i32
    %140 = arith.muli %c5_i32_85, %c8_i32_86 : i32
    %141 = tpu.assume_multiple %140, 8 : i32
    %cst_87 = arith.constant dense<0.000000e+00> : vector<8x128xf32>
    %142 = tpu.matmul %137, %92, %cst_87 {dimension_numbers = #tpu.dot_dimension_numbers<[1], [0], [0], [1], [0, 0, 1, 1], [], []>} : vector<8x128xf32>, vector<128x128xf32>, vector<8x128xf32> -> vector<8x128xf32>
    %143 = arith.index_cast %141 : i32 to index
    %c0_88 = arith.constant 0 : index
    %144 = vector.load %arg12[%143, %c0_88] : memref<64x128xf32, #tpu.memory_space<vmem>>, vector<8x128xf32>
    %145 = arith.addf %142, %144 : vector<8x128xf32>
    %146 = math.tanh %145 : vector<8x128xf32>
    %147 = arith.index_cast %141 : i32 to index
    %c0_89 = arith.constant 0 : index
    %148 = vector.load %arg12[%147, %c0_89] : memref<64x128xf32, #tpu.memory_space<vmem>>, vector<8x128xf32>
    tpu.vector_store %arg12[%147, %c0_89], %146 {strides = array<i32>} : memref<64x128xf32, #tpu.memory_space<vmem>>, vector<8x128xf32>,
    %c6_i32_90 = arith.constant 6 : i32
    %c8_i32_91 = arith.constant 8 : i32
    %149 = arith.muli %c6_i32_90, %c8_i32_91 : i32
    %150 = tpu.assume_multiple %149, 8 : i32
    %cst_92 = arith.constant dense<0.000000e+00> : vector<8x128xf32>
    %151 = tpu.matmul %146, %92, %cst_92 {dimension_numbers = #tpu.dot_dimension_numbers<[1], [0], [0], [1], [0, 0, 1, 1], [], []>} : vector<8x128xf32>, vector<128x128xf32>, vector<8x128xf32> -> vector<8x128xf32>
    %152 = arith.index_cast %150 : i32 to index
    %c0_93 = arith.constant 0 : index
    %153 = vector.load %arg12[%152, %c0_93] : memref<64x128xf32, #tpu.memory_space<vmem>>, vector<8x128xf32>
    %154 = arith.addf %151, %153 : vector<8x128xf32>
    %155 = math.tanh %154 : vector<8x128xf32>
    %156 = arith.index_cast %150 : i32 to index
    %c0_94 = arith.constant 0 : index
    %157 = vector.load %arg12[%156, %c0_94] : memref<64x128xf32, #tpu.memory_space<vmem>>, vector<8x128xf32>
    tpu.vector_store %arg12[%156, %c0_94], %155 {strides = array<i32>} : memref<64x128xf32, #tpu.memory_space<vmem>>, vector<8x128xf32>,
    %c7_i32_95 = arith.constant 7 : i32
    %c8_i32_96 = arith.constant 8 : i32
    %158 = arith.muli %c7_i32_95, %c8_i32_96 : i32
    %159 = tpu.assume_multiple %158, 8 : i32
    %cst_97 = arith.constant dense<0.000000e+00> : vector<8x128xf32>
    %160 = tpu.matmul %155, %92, %cst_97 {dimension_numbers = #tpu.dot_dimension_numbers<[1], [0], [0], [1], [0, 0, 1, 1], [], []>} : vector<8x128xf32>, vector<128x128xf32>, vector<8x128xf32> -> vector<8x128xf32>
    %161 = arith.index_cast %159 : i32 to index
    %c0_98 = arith.constant 0 : index
    %162 = vector.load %arg12[%161, %c0_98] : memref<64x128xf32, #tpu.memory_space<vmem>>, vector<8x128xf32>
    %163 = arith.addf %160, %162 : vector<8x128xf32>
    %164 = math.tanh %163 : vector<8x128xf32>
    %165 = arith.index_cast %159 : i32 to index
    %c0_99 = arith.constant 0 : index
    %166 = vector.load %arg12[%165, %c0_99] : memref<64x128xf32, #tpu.memory_space<vmem>>, vector<8x128xf32>
    tpu.vector_store %arg12[%165, %c0_99], %164 {strides = array<i32>} : memref<64x128xf32, #tpu.memory_space<vmem>>, vector<8x128xf32>,
    %c8_i32_100 = arith.constant 8 : i32
    %c1_101 = arith.constant 1 : index
    %c0_102 = arith.constant 0 : index
    %c0_103 = arith.constant 0 : index
    %167 = vector.load %arg11[%c1_101, %c0_102, %c0_103] : memref<2x8x128xf32, #tpu.memory_space<vmem>>, vector<1x8x128xf32>
    %168 = vector.shape_cast %167 : vector<1x8x128xf32> to vector<8x128xf32>
    %169 = vector.shape_cast %164 : vector<8x128xf32> to vector<1x8x128xf32>
    tpu.vector_store %arg11[%c1_101, %c0_102, %c0_103], %169 {strides = array<i32>} : memref<2x8x128xf32, #tpu.memory_space<vmem>>, vector<1x8x128xf32>,
    %c0_104 = arith.constant 0 : index
    %c0_105 = arith.constant 0 : index
    %170 = vector.load %arg12[%c0_104, %c0_105] : memref<64x128xf32, #tpu.memory_space<vmem>>, vector<64x128xf32>
    %c0_106 = arith.constant 0 : index
    %c0_107 = arith.constant 0 : index
    %171 = vector.load %arg8[%c0_106, %c0_107] : memref<128x128xf32, #tpu.memory_space<vmem>>, vector<128x128xf32>
    %cst_108 = arith.constant dense<0.000000e+00> : vector<64x128xf32>
    %172 = tpu.matmul %170, %171, %cst_108 {dimension_numbers = #tpu.dot_dimension_numbers<[1], [0], [0], [1], [0, 0, 1, 1], [], []>} : vector<64x128xf32>, vector<128x128xf32>, vector<64x128xf32> -> vector<64x128xf32>
    %c0_109 = arith.constant 0 : index
    %c0_110 = arith.constant 0 : index
    %173 = vector.load %arg9[%c0_109, %c0_110] : memref<1x128xf32, #tpu.memory_space<vmem>>, vector<1x128xf32>
    %174 = vector.broadcast %173 : vector<1x128xf32> to vector<64x128xf32>
    %175 = arith.addf %172, %174 : vector<64x128xf32>
    %c0_111 = arith.constant 0 : index
    %c0_112 = arith.constant 0 : index
    %176 = vector.load %arg10[%c0_111, %c0_112] : memref<64x128xf32, #tpu.memory_space<vmem>>, vector<64x128xf32>
    tpu.vector_store %arg10[%c0_111, %c0_112], %175 {strides = array<i32>} : memref<64x128xf32, #tpu.memory_space<vmem>>, vector<64x128xf32>,
    return
  }
}

</mosaic_0001>

<llo_original>
// kernel: tpu_custom_call.1
$region0: #{tpu_custom_call.1}
  #allocation0 [shape = 'u32[]', space=smem, size = 0x4, offset = 0x4, fixed_abs, tag = 'smem constant byte address 0x4 - core index']
  #allocation1 [shape = 'u32[144,128]{1,0:T(1,128)}', space=vmem, size = 0x12000, scoped, tag = 'internal scratch']
  #allocation2 [shape = 'f32[64,128]{1,0:T(8,128)}', space=vmem, size = 0x8000, scoped, tag = 'scratch operand']
  %s0 = inlined_call_operand.hbm [shape: f32[64,128], index: 0, kind: input, shape index: {}]
  %s1 = inlined_call_operand.hbm [shape: f32[2,8,128], index: 1, kind: input, shape index: {}]
  %s2 = inlined_call_operand.hbm [shape: f32[128,128], index: 2, kind: input, shape index: {}]
  %s3 = inlined_call_operand.hbm [shape: f32[128,128], index: 3, kind: input, shape index: {}]
  %s4 = inlined_call_operand.vmem [shape: f32[1,128], index: 4, kind: input, shape index: {}]
  %s5 = inlined_call_operand.hbm [shape: f32[128,128], index: 5, kind: input, shape index: {}]
  %s6 = inlined_call_operand.hbm [shape: f32[128,128], index: 6, kind: input, shape index: {}]
  %s7 = inlined_call_operand.vmem [shape: f32[1,128], index: 7, kind: input, shape index: {}]
  %s8 = inlined_call_operand.hbm [shape: f32[128,128], index: 8, kind: input, shape index: {}]
  %s9 = inlined_call_operand.vmem [shape: f32[1,128], index: 9, kind: input, shape index: {}]
  %s10 = inlined_call_operand.hbm [shape: f32[64,128], index: 10, kind: output, shape index: {0}]
  %s11 = inlined_call_operand.hbm [shape: f32[2,8,128], index: 11, kind: output, shape index: {1}]
  %12 = xla_tuple %s10, %s11
  %s13 = sld [smem:[#allocation0]]
  $region86: #{tpu_custom_call.1} parent=0
    _
  %s15 = ssub.s32 1, %s13
  %s16 = scalar_select 0, %s15, %s13
  $region1: #{tpu_custom_call.1} parent=0
    #allocation3 [shape = 'u8[32768]{0}', space=vmem, size = 0x8000, scoped, tag = 'input window, operand 0, single buffered']
    #allocation4 [shape = 's32[1]{0}', space=sflag, size = 0x4, scoped, tag = 'scoped memory for tpu_custom_call.1']
    #allocation5 [shape = 's32[1]{0}', space=sflag, size = 0x4, scoped, tag = 'scoped memory for tpu_custom_call.1']
    #allocation6 [shape = 'u8[8192]{0}', space=vmem, size = 0x2000, scoped, tag = 'input window, operand 1, single buffered']
    #allocation7 [shape = 's32[1]{0}', space=sflag, size = 0x4, scoped, tag = 'scoped memory for tpu_custom_call.1']
    #allocation8 [shape = 'u8[65536]{0}', space=vmem, size = 0x10000, scoped, tag = 'input window, operand 2, single buffered']
    #allocation9 [shape = 'u8[65536]{0}', space=vmem, size = 0x10000, scoped, tag = 'input window, operand 3, single buffered']
    #allocation10 [shape = 's32[1]{0}', space=sflag, size = 0x4, scoped, tag = 'scoped memory for tpu_custom_call.1']
    #allocation11 [shape = 'u8[65536]{0}', space=vmem, size = 0x10000, scoped, tag = 'input window, operand 5, single buffered']
    #allocation12 [shape = 'u8[65536]{0}', space=vmem, size = 0x10000, scoped, tag = 'input window, operand 6, single buffered']
    #allocation13 [shape = 's32[1]{0}', space=sflag, size = 0x4, scoped, tag = 'scoped memory for tpu_custom_call.1']
    #allocation14 [shape = 'u8[65536]{0}', space=vmem, size = 0x10000, scoped, tag = 'input window, operand 8, single buffered']
    #allocation15 [shape = 'u8[32768]{0}', space=vmem, size = 0x8000, scoped, tag = 'output window, operand 0, single buffered']
    #allocation16 [shape = 'u8[8192]{0}', space=vmem, size = 0x2000, scoped, tag = 'output window, operand 1, single buffered']
    #allocation17 [shape = 's32[1]{0}', space=sflag, size = 0x4, scoped, tag = 'scoped memory for tpu_custom_call.1']
    %17 = vsyncpa [#allocation4], 0
    %18 = vsyncpa [#allocation7], 0
    %19 = vsyncpa [#allocation10], 0
    %20 = vsyncpa [#allocation13], 0
    %21 = vsyncpa [#allocation5], 0
    %22 = vsyncpa [#allocation17], 0
    // Predicated region
    $region2: #{tpu_custom_call.1} parent=1 // pred_check
      _
    $region3: #{tpu_custom_call.1} parent=1 // pred_check_branch
      %24 = sbr.rel (0) target = $region5
    $region4: #{tpu_custom_call.1} parent=1 // pred_region
      %s26 = ssub.s32 1024, 1024
      %27 = vsyncadd [#allocation4], %s26
      %s28 = sshll.u32 [#allocation3], 4
      %s29 = int_to_ptr.vmem [resolvable:$true] %s28
      %34 = dma.hbm_to_vmem [thread:$0]  %s0, 1024, %s29, [#allocation4], 128, 128, 8
    $region5: #{tpu_custom_call.1} parent=1 // pred_fallthru
      _
    // Predicated region
    $region6: #{tpu_custom_call.1} parent=1 // pred_check
      _
    $region7: #{tpu_custom_call.1} parent=1 // pred_check_branch
      %36 = sbr.rel (0) target = $region9
    $region8: #{tpu_custom_call.1} parent=1 // pred_region
      %s38 = ssub.s32 256, 256
      %39 = vsyncadd [#allocation7], %s38
      %s40 = sshll.u32 [#allocation6], 4
      %s41 = int_to_ptr.vmem [resolvable:$true] %s40
      %46 = dma.hbm_to_vmem [thread:$0]  %s1, 256, %s41, [#allocation7], 128, 128, 8
    $region9: #{tpu_custom_call.1} parent=1 // pred_fallthru
      _
    // Predicated region
    $region10: #{tpu_custom_call.1} parent=1 // pred_check
      _
    $region11: #{tpu_custom_call.1} parent=1 // pred_check_branch
      %48 = sbr.rel (0) target = $region13
    $region12: #{tpu_custom_call.1} parent=1 // pred_region
      %s50 = ssub.s32 2048, 2048
      %51 = vsyncadd [#allocation7], %s50
      %s52 = sshll.u32 [#allocation8], 4
      %s53 = int_to_ptr.vmem [resolvable:$true] %s52
      %58 = dma.hbm_to_vmem [thread:$0]  %s2, 2048, %s53, [#allocation7], 128, 128, 8
    $region13: #{tpu_custom_call.1} parent=1 // pred_fallthru
      _
    // Predicated region
    $region14: #{tpu_custom_call.1} parent=1 // pred_check
      _
    $region15: #{tpu_custom_call.1} parent=1 // pred_check_branch
      %60 = sbr.rel (0) target = $region17
    $region16: #{tpu_custom_call.1} parent=1 // pred_region
      %s62 = ssub.s32 2048, 2048
      %63 = vsyncadd [#allocation10], %s62
      %s64 = sshll.u32 [#allocation9], 4
      %s65 = int_to_ptr.vmem [resolvable:$true] %s64
      %70 = dma.hbm_to_vmem [thread:$0]  %s3, 2048, %s65, [#allocation10], 128, 128, 8
    $region17: #{tpu_custom_call.1} parent=1 // pred_fallthru
      _
    // Predicated region
    $region18: #{tpu_custom_call.1} parent=1 // pred_check
      _
    $region19: #{tpu_custom_call.1} parent=1 // pred_check_branch
      %72 = sbr.rel (0) target = $region21
    $region20: #{tpu_custom_call.1} parent=1 // pred_region
      _
    $region21: #{tpu_custom_call.1} parent=1 // pred_fallthru
      _
    // Predicated region
    $region22: #{tpu_custom_call.1} parent=1 // pred_check
      _
    $region23: #{tpu_custom_call.1} parent=1 // pred_check_branch
      %74 = sbr.rel (0) target = $region25
    $region24: #{tpu_custom_call.1} parent=1 // pred_region
      %s76 = ssub.s32 2048, 2048
      %77 = vsyncadd [#allocation10], %s76
      %s78 = sshll.u32 [#allocation11], 4
      %s79 = int_to_ptr.vmem [resolvable:$true] %s78
      %84 = dma.hbm_to_vmem [thread:$0]  %s5, 2048, %s79, [#allocation10], 128, 128, 8
    $region25: #{tpu_custom_call.1} parent=1 // pred_fallthru
      _
    // Predicated region
    $region26: #{tpu_custom_call.1} parent=1 // pred_check
      _
    $region27: #{tpu_custom_call.1} parent=1 // pred_check_branch
      %86 = sbr.rel (0) target = $region29
    $region28: #{tpu_custom_call.1} parent=1 // pred_region
      %s88 = ssub.s32 2048, 2048
      %89 = vsyncadd [#allocation13], %s88
      %s90 = sshll.u32 [#allocation12], 4
      %s91 = int_to_ptr.vmem [resolvable:$true] %s90
      %96 = dma.hbm_to_vmem [thread:$0]  %s6, 2048, %s91, [#allocation13], 128, 128, 8
    $region29: #{tpu_custom_call.1} parent=1 // pred_fallthru
      _
    // Predicated region
    $region30: #{tpu_custom_call.1} parent=1 // pred_check
      _
    $region31: #{tpu_custom_call.1} parent=1 // pred_check_branch
      %98 = sbr.rel (0) target = $region33
    $region32: #{tpu_custom_call.1} parent=1 // pred_region
      _
    $region33: #{tpu_custom_call.1} parent=1 // pred_fallthru
      _
    // Predicated region
    $region34: #{tpu_custom_call.1} parent=1 // pred_check
      _
    $region35: #{tpu_custom_call.1} parent=1 // pred_check_branch
      %100 = sbr.rel (0) target = $region37
    $region36: #{tpu_custom_call.1} parent=1 // pred_region
      %s102 = ssub.s32 2048, 2048
      %103 = vsyncadd [#allocation13], %s102
      %s104 = sshll.u32 [#allocation14], 4
      %s105 = int_to_ptr.vmem [resolvable:$true] %s104
      %110 = dma.hbm_to_vmem [thread:$0]  %s8, 2048, %s105, [#allocation13], 128, 128, 8
    $region37: #{tpu_custom_call.1} parent=1 // pred_fallthru
      _
    // Predicated region
    $region38: #{tpu_custom_call.1} parent=1 // pred_check
      _
    $region39: #{tpu_custom_call.1} parent=1 // pred_check_branch
      %112 = sbr.rel (0) target = $region41
    $region40: #{tpu_custom_call.1} parent=1 // pred_region
      _
    $region41: #{tpu_custom_call.1} parent=1 // pred_fallthru
      _
    // Predicated region
    $region42: #{tpu_custom_call.1} parent=1 // pred_check
      _
    $region43: #{tpu_custom_call.1} parent=1 // pred_check_branch
      %114 = sbr.rel (0) target = $region45
    $region44: #{tpu_custom_call.1} parent=1 // pred_region
      %115 = dma.done [#allocation4], 1024
    $region45: #{tpu_custom_call.1} parent=1 // pred_fallthru
      _
    // Predicated region
    $region46: #{tpu_custom_call.1} parent=1 // pred_check
      _
    $region47: #{tpu_custom_call.1} parent=1 // pred_check_branch
      %117 = sbr.rel (0) target = $region49
    $region48: #{tpu_custom_call.1} parent=1 // pred_region
      %118 = dma.done [#allocation7], 256
    $region49: #{tpu_custom_call.1} parent=1 // pred_fallthru
      _
    // Predicated region
    $region50: #{tpu_custom_call.1} parent=1 // pred_check
      _
    $region51: #{tpu_custom_call.1} parent=1 // pred_check_branch
      %120 = sbr.rel (0) target = $region53
    $region52: #{tpu_custom_call.1} parent=1 // pred_region
      %121 = dma.done [#allocation7], 2048
    $region53: #{tpu_custom_call.1} parent=1 // pred_fallthru
      _
    // Predicated region
    $region54: #{tpu_custom_call.1} parent=1 // pred_check
      _
    $region55: #{tpu_custom_call.1} parent=1 // pred_check_branch
      %123 = sbr.rel (0) target = $region57
    $region56: #{tpu_custom_call.1} parent=1 // pred_region
      %124 = dma.done [#allocation10], 2048
    $region57: #{tpu_custom_call.1} parent=1 // pred_fallthru
      _
    // Predicated region
    $region58: #{tpu_custom_call.1} parent=1 // pred_check
      _
    $region59: #{tpu_custom_call.1} parent=1 // pred_check_branch
      %126 = sbr.rel (0) target = $region61
    $region60: #{tpu_custom_call.1} parent=1 // pred_region
      %127 = dma.done [#allocation10], 2048
    $region61: #{tpu_custom_call.1} parent=1 // pred_fallthru
      _
    // Predicated region
    $region62: #{tpu_custom_call.1} parent=1 // pred_check
      _
    $region63: #{tpu_custom_call.1} parent=1 // pred_check_branch
      %129 = sbr.rel (0) target = $region65
    $region64: #{tpu_custom_call.1} parent=1 // pred_region
      %130 = dma.done [#allocation13], 2048
    $region65: #{tpu_custom_call.1} parent=1 // pred_fallthru
      _
    // Predicated region
    $region66: #{tpu_custom_call.1} parent=1 // pred_check
      _
    $region67: #{tpu_custom_call.1} parent=1 // pred_check_branch
      %132 = sbr.rel (0) target = $region69
    $region68: #{tpu_custom_call.1} parent=1 // pred_region
      %133 = dma.done [#allocation13], 2048
    $region69: #{tpu_custom_call.1} parent=1 // pred_fallthru
      _
    %v134 = vld [vmem:[#allocation3] sm:$0xff]
    %v135 = vld [vmem:[#allocation3 + $0x8] sm:$0xff]
    %v136 = vld [vmem:[#allocation3 + $0x10] sm:$0xff]
    %v137 = vld [vmem:[#allocation3 + $0x18] sm:$0xff]
    %v138 = vld [vmem:[#allocation3 + $0x20] sm:$0xff]
    %v139 = vld [vmem:[#allocation3 + $0x28] sm:$0xff]
    %v140 = vld [vmem:[#allocation3 + $0x30] sm:$0xff]
    %v141 = vld [vmem:[#allocation3 + $0x38] sm:$0xff]
    %v142 = vld [vmem:[#allocation8] sm:$0xff]
    %v143 = vld [vmem:[#allocation8 + $0x8] sm:$0xff]
    %v144 = vld [vmem:[#allocation8 + $0x10] sm:$0xff]
    %v145 = vld [vmem:[#allocation8 + $0x18] sm:$0xff]
    %v146 = vld [vmem:[#allocation8 + $0x20] sm:$0xff]
    %v147 = vld [vmem:[#allocation8 + $0x28] sm:$0xff]
    %v148 = vld [vmem:[#allocation8 + $0x30] sm:$0xff]
    %v149 = vld [vmem:[#allocation8 + $0x38] sm:$0xff]
    %v150 = vld [vmem:[#allocation8 + $0x40] sm:$0xff]
    %v151 = vld [vmem:[#allocation8 + $0x48] sm:$0xff]
    %v152 = vld [vmem:[#allocation8 + $0x50] sm:$0xff]
    %v153 = vld [vmem:[#allocation8 + $0x58] sm:$0xff]
    %v154 = vld [vmem:[#allocation8 + $0x60] sm:$0xff]
    %v155 = vld [vmem:[#allocation8 + $0x68] sm:$0xff]
    %v156 = vld [vmem:[#allocation8 + $0x70] sm:$0xff]
    %v157 = vld [vmem:[#allocation8 + $0x78] sm:$0xff]
    %v158 = vld [vmem:[%s4] sm:$0x1]
    %v160 = vlaneseq
    %v161 = vshrl.u32 %v160, 7
    %v162 = vsub.s32 0, %v161
    %v163 = vrot.slane %v158, %v162
    %165 = vmatprep.subr.mxu0 0.0
    %166 = vmatpush1.msra.mxu0 %v157
    %167 = vmatprep.subr.mxu0 0.0
    %168 = vmatpush1.msra.mxu0 %v156
    %169 = vmatprep.subr.mxu0 0.0
    %170 = vmatpush1.msra.mxu0 %v155
    %171 = vmatprep.subr.mxu0 0.0
    %172 = vmatpush1.msra.mxu0 %v154
    %173 = vmatprep.subr.mxu0 0.0
    %174 = vmatpush1.msra.mxu0 %v153
    %175 = vmatprep.subr.mxu0 0.0
    %176 = vmatpush1.msra.mxu0 %v152
    %177 = vmatprep.subr.mxu0 0.0
    %178 = vmatpush1.msra.mxu0 %v151
    %179 = vmatprep.subr.mxu0 0.0
    %180 = vmatpush1.msra.mxu0 %v150
    %181 = vmatprep.subr.mxu0 0.0
    %182 = vmatpush1.msra.mxu0 %v149
    %183 = vmatprep.subr.mxu0 0.0
    %184 = vmatpush1.msra.mxu0 %v148
    %185 = vmatprep.subr.mxu0 0.0
    %186 = vmatpush1.msra.mxu0 %v147
    %187 = vmatprep.subr.mxu0 0.0
    %188 = vmatpush1.msra.mxu0 %v146
    %189 = vmatprep.subr.mxu0 0.0
    %190 = vmatpush1.msra.mxu0 %v145
    %191 = vmatprep.subr.mxu0 0.0
    %192 = vmatpush1.msra.mxu0 %v144
    %193 = vmatprep.subr.mxu0 0.0
    %194 = vmatpush1.msra.mxu0 %v143
    %195 = vmatprep.subr.mxu0 0.0
    %196 = vmatpush1.msra.mxu0 %v142
    %197 = vmatprep.subr.mxu0 0.0
    %198 = vmatpush2.msra.mxu0 0.0
    %199 = vmatprep.subr.mxu0 0.0
    %200 = vmatpush2.msra.mxu0 0.0
    %201 = vmatprep.subr.mxu0 0.0
    %202 = vmatpush2.msra.mxu0 0.0
    %203 = vmatprep.subr.mxu0 0.0
    %204 = vmatpush2.msra.mxu0 0.0
    %205 = vmatprep.subr.mxu0 0.0
    %206 = vmatpush2.msra.mxu0 0.0
    %207 = vmatprep.subr.mxu0 0.0
    %208 = vmatpush2.msra.mxu0 0.0
    %209 = vmatprep.subr.mxu0 0.0
    %210 = vmatpush2.msra.mxu0 0.0
    %211 = vmatprep.subr.mxu0 0.0
    %212 = vmatpush2.msra.mxu0 0.0
    %213 = vmatprep.subr.mxu0 0.0
    %214 = vmatpush2.msra.mxu0 0.0
    %215 = vmatprep.subr.mxu0 0.0
    %216 = vmatpush2.msra.mxu0 0.0
    %217 = vmatprep.subr.mxu0 0.0
    %218 = vmatpush2.msra.mxu0 0.0
    %219 = vmatprep.subr.mxu0 0.0
    %220 = vmatpush2.msra.mxu0 0.0
    %221 = vmatprep.subr.mxu0 0.0
    %222 = vmatpush2.msra.mxu0 0.0
    %223 = vmatprep.subr.mxu0 0.0
    %224 = vmatpush2.msra.mxu0 0.0
    %225 = vmatprep.subr.mxu0 0.0
    %226 = vmatpush2.msra.mxu0 0.0
    %227 = vmatprep.subr.mxu0 0.0
    %228 = vmatpush2.msra.mxu0 0.0
    %229 = vmatprep.mubr.f32.mxu0 0.0
    %230 = vmatmul.mubr.f32.gmra.mxu0 %v134
    %v231 = vpop.f32.mrf.mxu0
    %v232 = vadd.f32 %v163, %v231
    %v233 = vpop.f32.mrf.mxu0
    %234 = vmatprep.mubr.f32.mxu0 0.0
    %235 = vmatmul.mubr.f32.gmra.mxu0 %v135
    %v236 = vpop.f32.mrf.mxu0
    %v237 = vadd.f32 %v163, %v236
    %v238 = vpop.f32.mrf.mxu0
    %239 = vmatprep.mubr.f32.mxu0 0.0
    %240 = vmatmul.mubr.f32.gmra.mxu0 %v136
    %v241 = vpop.f32.mrf.mxu0
    %v242 = vadd.f32 %v163, %v241
    %v243 = vpop.f32.mrf.mxu0
    %244 = vmatprep.mubr.f32.mxu0 0.0
    %245 = vmatmul.mubr.f32.gmra.mxu0 %v137
    %v246 = vpop.f32.mrf.mxu0
    %v247 = vadd.f32 %v163, %v246
    %v248 = vpop.f32.mrf.mxu0
    %249 = vmatprep.mubr.f32.mxu0 0.0
    %250 = vmatmul.mubr.f32.gmra.mxu0 %v138
    %v251 = vpop.f32.mrf.mxu0
    %v252 = vadd.f32 %v163, %v251
    %v253 = vpop.f32.mrf.mxu0
    %254 = vmatprep.mubr.f32.mxu0 0.0
    %255 = vmatmul.mubr.f32.gmra.mxu0 %v139
    %v256 = vpop.f32.mrf.mxu0
    %v257 = vadd.f32 %v163, %v256
    %v258 = vpop.f32.mrf.mxu0
    %259 = vmatprep.mubr.f32.mxu0 0.0
    %260 = vmatmul.mubr.f32.gmra.mxu0 %v140
    %v261 = vpop.f32.mrf.mxu0
    %v262 = vadd.f32 %v163, %v261
    %v263 = vpop.f32.mrf.mxu0
    %264 = vmatprep.mubr.f32.mxu0 0.0
    %265 = vmatmul.mubr.f32.gmra.mxu0 %v141
    %v266 = vpop.f32.mrf.mxu0
    %v267 = vadd.f32 %v163, %v266
    %v268 = vpop.f32.mrf.mxu0
    %269 = vdwg.mxu0
    %270 = vst [vmem:[#allocation2] sm:$0xff] %v232
    %271 = vst [vmem:[#allocation2 + $0x8] sm:$0xff] %v237
    %272 = vst [vmem:[#allocation2 + $0x10] sm:$0xff] %v242
    %273 = vst [vmem:[#allocation2 + $0x18] sm:$0xff] %v247
    %274 = vst [vmem:[#allocation2 + $0x20] sm:$0xff] %v252
    %275 = vst [vmem:[#allocation2 + $0x28] sm:$0xff] %v257
    %276 = vst [vmem:[#allocation2 + $0x30] sm:$0xff] %v262
    %277 = vst [vmem:[#allocation2 + $0x38] sm:$0xff] %v267
    %v278 = vld [vmem:[#allocation9] sm:$0xff]
    %v279 = vld [vmem:[#allocation9 + $0x8] sm:$0xff]
    %v280 = vld [vmem:[#allocation9 + $0x10] sm:$0xff]
    %v281 = vld [vmem:[#allocation9 + $0x18] sm:$0xff]
    %v282 = vld [vmem:[#allocation9 + $0x20] sm:$0xff]
    %v283 = vld [vmem:[#allocation9 + $0x28] sm:$0xff]
    %v284 = vld [vmem:[#allocation9 + $0x30] sm:$0xff]
    %v285 = vld [vmem:[#allocation9 + $0x38] sm:$0xff]
    %v286 = vld [vmem:[#allocation9 + $0x40] sm:$0xff]
    %v287 = vld [vmem:[#allocation9 + $0x48] sm:$0xff]
    %v288 = vld [vmem:[#allocation9 + $0x50] sm:$0xff]
    %v289 = vld [vmem:[#allocation9 + $0x58] sm:$0xff]
    %v290 = vld [vmem:[#allocation9 + $0x60] sm:$0xff]
    %v291 = vld [vmem:[#allocation9 + $0x68] sm:$0xff]
    %v292 = vld [vmem:[#allocation9 + $0x70] sm:$0xff]
    %v293 = vld [vmem:[#allocation9 + $0x78] sm:$0xff]
    %v294 = vld [vmem:[#allocation6] sm:$0xff]
    %v295 = vld [vmem:[#allocation2] sm:$0xff]
    %296 = vmatprep.subr.mxu0 0.0
    %297 = vmatpush1.msra.mxu0 %v293
    %298 = vmatprep.subr.mxu0 0.0
    %299 = vmatpush1.msra.mxu0 %v292
    %300 = vmatprep.subr.mxu0 0.0
    %301 = vmatpush1.msra.mxu0 %v291
    %302 = vmatprep.subr.mxu0 0.0
    %303 = vmatpush1.msra.mxu0 %v290
    %304 = vmatprep.subr.mxu0 0.0
    %305 = vmatpush1.msra.mxu0 %v289
    %306 = vmatprep.subr.mxu0 0.0
    %307 = vmatpush1.msra.mxu0 %v288
    %308 = vmatprep.subr.mxu0 0.0
    %309 = vmatpush1.msra.mxu0 %v287
    %310 = vmatprep.subr.mxu0 0.0
    %311 = vmatpush1.msra.mxu0 %v286
    %312 = vmatprep.subr.mxu0 0.0
    %313 = vmatpush1.msra.mxu0 %v285
    %314 = vmatprep.subr.mxu0 0.0
    %315 = vmatpush1.msra.mxu0 %v284
    %316 = vmatprep.subr.mxu0 0.0
    %317 = vmatpush1.msra.mxu0 %v283
    %318 = vmatprep.subr.mxu0 0.0
    %319 = vmatpush1.msra.mxu0 %v282
    %320 = vmatprep.subr.mxu0 0.0
    %321 = vmatpush1.msra.mxu0 %v281
    %322 = vmatprep.subr.mxu0 0.0
    %323 = vmatpush1.msra.mxu0 %v280
    %324 = vmatprep.subr.mxu0 0.0
    %325 = vmatpush1.msra.mxu0 %v279
    %326 = vmatprep.subr.mxu0 0.0
    %327 = vmatpush1.msra.mxu0 %v278
    %328 = vmatprep.subr.mxu0 0.0
    %329 = vmatpush2.msra.mxu0 0.0
    %330 = vmatprep.subr.mxu0 0.0
    %331 = vmatpush2.msra.mxu0 0.0
    %332 = vmatprep.subr.mxu0 0.0
    %333 = vmatpush2.msra.mxu0 0.0
    %334 = vmatprep.subr.mxu0 0.0
    %335 = vmatpush2.msra.mxu0 0.0
    %336 = vmatprep.subr.mxu0 0.0
    %337 = vmatpush2.msra.mxu0 0.0
    %338 = vmatprep.subr.mxu0 0.0
    %339 = vmatpush2.msra.mxu0 0.0
    %340 = vmatprep.subr.mxu0 0.0
    %341 = vmatpush2.msra.mxu0 0.0
    %342 = vmatprep.subr.mxu0 0.0
    %343 = vmatpush2.msra.mxu0 0.0
    %344 = vmatprep.subr.mxu0 0.0
    %345 = vmatpush2.msra.mxu0 0.0
    %346 = vmatprep.subr.mxu0 0.0
    %347 = vmatpush2.msra.mxu0 0.0
    %348 = vmatprep.subr.mxu0 0.0
    %349 = vmatpush2.msra.mxu0 0.0
    %350 = vmatprep.subr.mxu0 0.0
    %351 = vmatpush2.msra.mxu0 0.0
    %352 = vmatprep.subr.mxu0 0.0
    %353 = vmatpush2.msra.mxu0 0.0
    %354 = vmatprep.subr.mxu0 0.0
    %355 = vmatpush2.msra.mxu0 0.0
    %356 = vmatprep.subr.mxu0 0.0
    %357 = vmatpush2.msra.mxu0 0.0
    %358 = vmatprep.subr.mxu0 0.0
    %359 = vmatpush2.msra.mxu0 0.0
    %360 = vmatprep.mubr.f32.mxu0 0.0
    %361 = vmatmul.mubr.f32.gmra.mxu0 %v294
    %v362 = vpop.f32.mrf.mxu0
    %v363 = vadd.f32 %v295, %v362
    %v364 = vpop.f32.mrf.mxu0
    %365 = vdwg.mxu0
    %v366 = vtanh.pop %v363
    %367 = vst [vmem:[#allocation2] sm:$0xff] %v366
    %s368 = scalar_lea.vmem [#allocation2], 8
    %v369 = vld [vmem:[%s368] sm:$0xff]
    %370 = vmatprep.subr.mxu0 0.0
    %371 = vmatpush1.msra.mxu0 %v293
    %372 = vmatprep.subr.mxu0 0.0
    %373 = vmatpush1.msra.mxu0 %v292
    %374 = vmatprep.subr.mxu0 0.0
    %375 = vmatpush1.msra.mxu0 %v291
    %376 = vmatprep.subr.mxu0 0.0
    %377 = vmatpush1.msra.mxu0 %v290
    %378 = vmatprep.subr.mxu0 0.0
    %379 = vmatpush1.msra.mxu0 %v289
    %380 = vmatprep.subr.mxu0 0.0
    %381 = vmatpush1.msra.mxu0 %v288
    %382 = vmatprep.subr.mxu0 0.0
    %383 = vmatpush1.msra.mxu0 %v287
    %384 = vmatprep.subr.mxu0 0.0
    %385 = vmatpush1.msra.mxu0 %v286
    %386 = vmatprep.subr.mxu0 0.0
    %387 = vmatpush1.msra.mxu0 %v285
    %388 = vmatprep.subr.mxu0 0.0
    %389 = vmatpush1.msra.mxu0 %v284
    %390 = vmatprep.subr.mxu0 0.0
    %391 = vmatpush1.msra.mxu0 %v283
    %392 = vmatprep.subr.mxu0 0.0
    %393 = vmatpush1.msra.mxu0 %v282
    %394 = vmatprep.subr.mxu0 0.0
    %395 = vmatpush1.msra.mxu0 %v281
    %396 = vmatprep.subr.mxu0 0.0
    %397 = vmatpush1.msra.mxu0 %v280
    %398 = vmatprep.subr.mxu0 0.0
    %399 = vmatpush1.msra.mxu0 %v279
    %400 = vmatprep.subr.mxu0 0.0
    %401 = vmatpush1.msra.mxu0 %v278
    %402 = vmatprep.subr.mxu0 0.0
    %403 = vmatpush2.msra.mxu0 0.0
    %404 = vmatprep.subr.mxu0 0.0
    %405 = vmatpush2.msra.mxu0 0.0
    %406 = vmatprep.subr.mxu0 0.0
    %407 = vmatpush2.msra.mxu0 0.0
    %408 = vmatprep.subr.mxu0 0.0
    %409 = vmatpush2.msra.mxu0 0.0
    %410 = vmatprep.subr.mxu0 0.0
    %411 = vmatpush2.msra.mxu0 0.0
    %412 = vmatprep.subr.mxu0 0.0
    %413 = vmatpush2.msra.mxu0 0.0
    %414 = vmatprep.subr.mxu0 0.0
    %415 = vmatpush2.msra.mxu0 0.0
    %416 = vmatprep.subr.mxu0 0.0
    %417 = vmatpush2.msra.mxu0 0.0
    %418 = vmatprep.subr.mxu0 0.0
    %419 = vmatpush2.msra.mxu0 0.0
    %420 = vmatprep.subr.mxu0 0.0
    %421 = vmatpush2.msra.mxu0 0.0
    %422 = vmatprep.subr.mxu0 0.0
    %423 = vmatpush2.msra.mxu0 0.0
    %424 = vmatprep.subr.mxu0 0.0
    %425 = vmatpush2.msra.mxu0 0.0
    %426 = vmatprep.subr.mxu0 0.0
    %427 = vmatpush2.msra.mxu0 0.0
    %428 = vmatprep.subr.mxu0 0.0
    %429 = vmatpush2.msra.mxu0 0.0
    %430 = vmatprep.subr.mxu0 0.0
    %431 = vmatpush2.msra.mxu0 0.0
    %432 = vmatprep.subr.mxu0 0.0
    %433 = vmatpush2.msra.mxu0 0.0
    %434 = vmatprep.mubr.f32.mxu0 0.0
    %435 = vmatmul.mubr.f32.gmra.mxu0 %v366
    %v436 = vpop.f32.mrf.mxu0
    %v437 = vadd.f32 %v369, %v436
    %v438 = vpop.f32.mrf.mxu0
    %439 = vdwg.mxu0
    %v440 = vtanh.pop %v437
    %441 = vst [vmem:[%s368] sm:$0xff] %v440
    %s442 = scalar_lea.vmem [#allocation2], 16
    %v443 = vld [vmem:[%s442] sm:$0xff]
    %444 = vmatprep.subr.mxu0 0.0
    %445 = vmatpush1.msra.mxu0 %v293
    %446 = vmatprep.subr.mxu0 0.0
    %447 = vmatpush1.msra.mxu0 %v292
    %448 = vmatprep.subr.mxu0 0.0
    %449 = vmatpush1.msra.mxu0 %v291
    %450 = vmatprep.subr.mxu0 0.0
    %451 = vmatpush1.msra.mxu0 %v290
    %452 = vmatprep.subr.mxu0 0.0
    %453 = vmatpush1.msra.mxu0 %v289
    %454 = vmatprep.subr.mxu0 0.0
    %455 = vmatpush1.msra.mxu0 %v288
    %456 = vmatprep.subr.mxu0 0.0
    %457 = vmatpush1.msra.mxu0 %v287
    %458 = vmatprep.subr.mxu0 0.0
    %459 = vmatpush1.msra.mxu0 %v286
    %460 = vmatprep.subr.mxu0 0.0
    %461 = vmatpush1.msra.mxu0 %v285
    %462 = vmatprep.subr.mxu0 0.0
    %463 = vmatpush1.msra.mxu0 %v284
    %464 = vmatprep.subr.mxu0 0.0
    %465 = vmatpush1.msra.mxu0 %v283
    %466 = vmatprep.subr.mxu0 0.0
    %467 = vmatpush1.msra.mxu0 %v282
    %468 = vmatprep.subr.mxu0 0.0
    %469 = vmatpush1.msra.mxu0 %v281
    %470 = vmatprep.subr.mxu0 0.0
    %471 = vmatpush1.msra.mxu0 %v280
    %472 = vmatprep.subr.mxu0 0.0
    %473 = vmatpush1.msra.mxu0 %v279
    %474 = vmatprep.subr.mxu0 0.0
    %475 = vmatpush1.msra.mxu0 %v278
    %476 = vmatprep.subr.mxu0 0.0
    %477 = vmatpush2.msra.mxu0 0.0
    %478 = vmatprep.subr.mxu0 0.0
    %479 = vmatpush2.msra.mxu0 0.0
    %480 = vmatprep.subr.mxu0 0.0
    %481 = vmatpush2.msra.mxu0 0.0
    %482 = vmatprep.subr.mxu0 0.0
    %483 = vmatpush2.msra.mxu0 0.0
    %484 = vmatprep.subr.mxu0 0.0
    %485 = vmatpush2.msra.mxu0 0.0
    %486 = vmatprep.subr.mxu0 0.0
    %487 = vmatpush2.msra.mxu0 0.0
    %488 = vmatprep.subr.mxu0 0.0
    %489 = vmatpush2.msra.mxu0 0.0
    %490 = vmatprep.subr.mxu0 0.0
    %491 = vmatpush2.msra.mxu0 0.0
    %492 = vmatprep.subr.mxu0 0.0
    %493 = vmatpush2.msra.mxu0 0.0
    %494 = vmatprep.subr.mxu0 0.0
    %495 = vmatpush2.msra.mxu0 0.0
    %496 = vmatprep.subr.mxu0 0.0
    %497 = vmatpush2.msra.mxu0 0.0
    %498 = vmatprep.subr.mxu0 0.0
    %499 = vmatpush2.msra.mxu0 0.0
    %500 = vmatprep.subr.mxu0 0.0
    %501 = vmatpush2.msra.mxu0 0.0
    %502 = vmatprep.subr.mxu0 0.0
    %503 = vmatpush2.msra.mxu0 0.0
    %504 = vmatprep.subr.mxu0 0.0
    %505 = vmatpush2.msra.mxu0 0.0
    %506 = vmatprep.subr.mxu0 0.0
    %507 = vmatpush2.msra.mxu0 0.0
    %508 = vmatprep.mubr.f32.mxu0 0.0
    %509 = vmatmul.mubr.f32.gmra.mxu0 %v440
    %v510 = vpop.f32.mrf.mxu0
    %v511 = vadd.f32 %v443, %v510
    %v512 = vpop.f32.mrf.mxu0
    %513 = vdwg.mxu0
    %v514 = vtanh.pop %v511
    %515 = vst [vmem:[%s442] sm:$0xff] %v514
    %s516 = scalar_lea.vmem [#allocation2], 24
    %v517 = vld [vmem:[%s516] sm:$0xff]
    %518 = vmatprep.subr.mxu0 0.0
    %519 = vmatpush1.msra.mxu0 %v293
    %520 = vmatprep.subr.mxu0 0.0
    %521 = vmatpush1.msra.mxu0 %v292
    %522 = vmatprep.subr.mxu0 0.0
    %523 = vmatpush1.msra.mxu0 %v291
    %524 = vmatprep.subr.mxu0 0.0
    %525 = vmatpush1.msra.mxu0 %v290
    %526 = vmatprep.subr.mxu0 0.0
    %527 = vmatpush1.msra.mxu0 %v289
    %528 = vmatprep.subr.mxu0 0.0
    %529 = vmatpush1.msra.mxu0 %v288
    %530 = vmatprep.subr.mxu0 0.0
    %531 = vmatpush1.msra.mxu0 %v287
    %532 = vmatprep.subr.mxu0 0.0
    %533 = vmatpush1.msra.mxu0 %v286
    %534 = vmatprep.subr.mxu0 0.0
    %535 = vmatpush1.msra.mxu0 %v285
    %536 = vmatprep.subr.mxu0 0.0
    %537 = vmatpush1.msra.mxu0 %v284
    %538 = vmatprep.subr.mxu0 0.0
    %539 = vmatpush1.msra.mxu0 %v283
    %540 = vmatprep.subr.mxu0 0.0
    %541 = vmatpush1.msra.mxu0 %v282
    %542 = vmatprep.subr.mxu0 0.0
    %543 = vmatpush1.msra.mxu0 %v281
    %544 = vmatprep.subr.mxu0 0.0
    %545 = vmatpush1.msra.mxu0 %v280
    %546 = vmatprep.subr.mxu0 0.0
    %547 = vmatpush1.msra.mxu0 %v279
    %548 = vmatprep.subr.mxu0 0.0
    %549 = vmatpush1.msra.mxu0 %v278
    %550 = vmatprep.subr.mxu0 0.0
    %551 = vmatpush2.msra.mxu0 0.0
    %552 = vmatprep.subr.mxu0 0.0
    %553 = vmatpush2.msra.mxu0 0.0
    %554 = vmatprep.subr.mxu0 0.0
    %555 = vmatpush2.msra.mxu0 0.0
    %556 = vmatprep.subr.mxu0 0.0
    %557 = vmatpush2.msra.mxu0 0.0
    %558 = vmatprep.subr.mxu0 0.0
    %559 = vmatpush2.msra.mxu0 0.0
    %560 = vmatprep.subr.mxu0 0.0
    %561 = vmatpush2.msra.mxu0 0.0
    %562 = vmatprep.subr.mxu0 0.0
    %563 = vmatpush2.msra.mxu0 0.0
    %564 = vmatprep.subr.mxu0 0.0
    %565 = vmatpush2.msra.mxu0 0.0
    %566 = vmatprep.subr.mxu0 0.0
    %567 = vmatpush2.msra.mxu0 0.0
    %568 = vmatprep.subr.mxu0 0.0
    %569 = vmatpush2.msra.mxu0 0.0
    %570 = vmatprep.subr.mxu0 0.0
    %571 = vmatpush2.msra.mxu0 0.0
    %572 = vmatprep.subr.mxu0 0.0
    %573 = vmatpush2.msra.mxu0 0.0
    %574 = vmatprep.subr.mxu0 0.0
    %575 = vmatpush2.msra.mxu0 0.0
    %576 = vmatprep.subr.mxu0 0.0
    %577 = vmatpush2.msra.mxu0 0.0
    %578 = vmatprep.subr.mxu0 0.0
    %579 = vmatpush2.msra.mxu0 0.0
    %580 = vmatprep.subr.mxu0 0.0
    %581 = vmatpush2.msra.mxu0 0.0
    %582 = vmatprep.mubr.f32.mxu0 0.0
    %583 = vmatmul.mubr.f32.gmra.mxu0 %v514
    %v584 = vpop.f32.mrf.mxu0
    %v585 = vadd.f32 %v517, %v584
    %v586 = vpop.f32.mrf.mxu0
    %587 = vdwg.mxu0
    %v588 = vtanh.pop %v585
    %589 = vst [vmem:[%s516] sm:$0xff] %v588
    %s590 = scalar_lea.vmem [#allocation2], 32
    %v591 = vld [vmem:[%s590] sm:$0xff]
    %592 = vmatprep.subr.mxu0 0.0
    %593 = vmatpush1.msra.mxu0 %v293
    %594 = vmatprep.subr.mxu0 0.0
    %595 = vmatpush1.msra.mxu0 %v292
    %596 = vmatprep.subr.mxu0 0.0
    %597 = vmatpush1.msra.mxu0 %v291
    %598 = vmatprep.subr.mxu0 0.0
    %599 = vmatpush1.msra.mxu0 %v290
    %600 = vmatprep.subr.mxu0 0.0
    %601 = vmatpush1.msra.mxu0 %v289
    %602 = vmatprep.subr.mxu0 0.0
    %603 = vmatpush1.msra.mxu0 %v288
    %604 = vmatprep.subr.mxu0 0.0
    %605 = vmatpush1.msra.mxu0 %v287
    %606 = vmatprep.subr.mxu0 0.0
    %607 = vmatpush1.msra.mxu0 %v286
    %608 = vmatprep.subr.mxu0 0.0
    %609 = vmatpush1.msra.mxu0 %v285
    %610 = vmatprep.subr.mxu0 0.0
    %611 = vmatpush1.msra.mxu0 %v284
    %612 = vmatprep.subr.mxu0 0.0
    %613 = vmatpush1.msra.mxu0 %v283
    %614 = vmatprep.subr.mxu0 0.0
    %615 = vmatpush1.msra.mxu0 %v282
    %616 = vmatprep.subr.mxu0 0.0
    %617 = vmatpush1.msra.mxu0 %v281
    %618 = vmatprep.subr.mxu0 0.0
    %619 = vmatpush1.msra.mxu0 %v280
    %620 = vmatprep.subr.mxu0 0.0
    %621 = vmatpush1.msra.mxu0 %v279
    %622 = vmatprep.subr.mxu0 0.0
    %623 = vmatpush1.msra.mxu0 %v278
    %624 = vmatprep.subr.mxu0 0.0
    %625 = vmatpush2.msra.mxu0 0.0
    %626 = vmatprep.subr.mxu0 0.0
    %627 = vmatpush2.msra.mxu0 0.0
    %628 = vmatprep.subr.mxu0 0.0
    %629 = vmatpush2.msra.mxu0 0.0
    %630 = vmatprep.subr.mxu0 0.0
    %631 = vmatpush2.msra.mxu0 0.0
    %632 = vmatprep.subr.mxu0 0.0
    %633 = vmatpush2.msra.mxu0 0.0
    %634 = vmatprep.subr.mxu0 0.0
    %635 = vmatpush2.msra.mxu0 0.0
    %636 = vmatprep.subr.mxu0 0.0
    %637 = vmatpush2.msra.mxu0 0.0
    %638 = vmatprep.subr.mxu0 0.0
    %639 = vmatpush2.msra.mxu0 0.0
    %640 = vmatprep.subr.mxu0 0.0
    %641 = vmatpush2.msra.mxu0 0.0
    %642 = vmatprep.subr.mxu0 0.0
    %643 = vmatpush2.msra.mxu0 0.0
    %644 = vmatprep.subr.mxu0 0.0
    %645 = vmatpush2.msra.mxu0 0.0
    %646 = vmatprep.subr.mxu0 0.0
    %647 = vmatpush2.msra.mxu0 0.0
    %648 = vmatprep.subr.mxu0 0.0
    %649 = vmatpush2.msra.mxu0 0.0
    %650 = vmatprep.subr.mxu0 0.0
    %651 = vmatpush2.msra.mxu0 0.0
    %652 = vmatprep.subr.mxu0 0.0
    %653 = vmatpush2.msra.mxu0 0.0
    %654 = vmatprep.subr.mxu0 0.0
    %655 = vmatpush2.msra.mxu0 0.0
    %656 = vmatprep.mubr.f32.mxu0 0.0
    %657 = vmatmul.mubr.f32.gmra.mxu0 %v588
    %v658 = vpop.f32.mrf.mxu0
    %v659 = vadd.f32 %v591, %v658
    %v660 = vpop.f32.mrf.mxu0
    %661 = vdwg.mxu0
    %v662 = vtanh.pop %v659
    %663 = vst [vmem:[%s590] sm:$0xff] %v662
    %s664 = scalar_lea.vmem [#allocation2], 40
    %v665 = vld [vmem:[%s664] sm:$0xff]
    %666 = vmatprep.subr.mxu0 0.0
    %667 = vmatpush1.msra.mxu0 %v293
    %668 = vmatprep.subr.mxu0 0.0
    %669 = vmatpush1.msra.mxu0 %v292
    %670 = vmatprep.subr.mxu0 0.0
    %671 = vmatpush1.msra.mxu0 %v291
    %672 = vmatprep.subr.mxu0 0.0
    %673 = vmatpush1.msra.mxu0 %v290
    %674 = vmatprep.subr.mxu0 0.0
    %675 = vmatpush1.msra.mxu0 %v289
    %676 = vmatprep.subr.mxu0 0.0
    %677 = vmatpush1.msra.mxu0 %v288
    %678 = vmatprep.subr.mxu0 0.0
    %679 = vmatpush1.msra.mxu0 %v287
    %680 = vmatprep.subr.mxu0 0.0
    %681 = vmatpush1.msra.mxu0 %v286
    %682 = vmatprep.subr.mxu0 0.0
    %683 = vmatpush1.msra.mxu0 %v285
    %684 = vmatprep.subr.mxu0 0.0
    %685 = vmatpush1.msra.mxu0 %v284
    %686 = vmatprep.subr.mxu0 0.0
    %687 = vmatpush1.msra.mxu0 %v283
    %688 = vmatprep.subr.mxu0 0.0
    %689 = vmatpush1.msra.mxu0 %v282
    %690 = vmatprep.subr.mxu0 0.0
    %691 = vmatpush1.msra.mxu0 %v281
    %692 = vmatprep.subr.mxu0 0.0
    %693 = vmatpush1.msra.mxu0 %v280
    %694 = vmatprep.subr.mxu0 0.0
    %695 = vmatpush1.msra.mxu0 %v279
    %696 = vmatprep.subr.mxu0 0.0
    %697 = vmatpush1.msra.mxu0 %v278
    %698 = vmatprep.subr.mxu0 0.0
    %699 = vmatpush2.msra.mxu0 0.0
    %700 = vmatprep.subr.mxu0 0.0
    %701 = vmatpush2.msra.mxu0 0.0
    %702 = vmatprep.subr.mxu0 0.0
    %703 = vmatpush2.msra.mxu0 0.0
    %704 = vmatprep.subr.mxu0 0.0
    %705 = vmatpush2.msra.mxu0 0.0
    %706 = vmatprep.subr.mxu0 0.0
    %707 = vmatpush2.msra.mxu0 0.0
    %708 = vmatprep.subr.mxu0 0.0
    %709 = vmatpush2.msra.mxu0 0.0
    %710 = vmatprep.subr.mxu0 0.0
    %711 = vmatpush2.msra.mxu0 0.0
    %712 = vmatprep.subr.mxu0 0.0
    %713 = vmatpush2.msra.mxu0 0.0
    %714 = vmatprep.subr.mxu0 0.0
    %715 = vmatpush2.msra.mxu0 0.0
    %716 = vmatprep.subr.mxu0 0.0
    %717 = vmatpush2.msra.mxu0 0.0
    %718 = vmatprep.subr.mxu0 0.0
    %719 = vmatpush2.msra.mxu0 0.0
    %720 = vmatprep.subr.mxu0 0.0
    %721 = vmatpush2.msra.mxu0 0.0
    %722 = vmatprep.subr.mxu0 0.0
    %723 = vmatpush2.msra.mxu0 0.0
    %724 = vmatprep.subr.mxu0 0.0
    %725 = vmatpush2.msra.mxu0 0.0
    %726 = vmatprep.subr.mxu0 0.0
    %727 = vmatpush2.msra.mxu0 0.0
    %728 = vmatprep.subr.mxu0 0.0
    %729 = vmatpush2.msra.mxu0 0.0
    %730 = vmatprep.mubr.f32.mxu0 0.0
    %731 = vmatmul.mubr.f32.gmra.mxu0 %v662
    %v732 = vpop.f32.mrf.mxu0
    %v733 = vadd.f32 %v665, %v732
    %v734 = vpop.f32.mrf.mxu0
    %735 = vdwg.mxu0
    %v736 = vtanh.pop %v733
    %737 = vst [vmem:[%s664] sm:$0xff] %v736
    %s738 = scalar_lea.vmem [#allocation2], 48
    %v739 = vld [vmem:[%s738] sm:$0xff]
    %740 = vmatprep.subr.mxu0 0.0
    %741 = vmatpush1.msra.mxu0 %v293
    %742 = vmatprep.subr.mxu0 0.0
    %743 = vmatpush1.msra.mxu0 %v292
    %744 = vmatprep.subr.mxu0 0.0
    %745 = vmatpush1.msra.mxu0 %v291
    %746 = vmatprep.subr.mxu0 0.0
    %747 = vmatpush1.msra.mxu0 %v290
    %748 = vmatprep.subr.mxu0 0.0
    %749 = vmatpush1.msra.mxu0 %v289
    %750 = vmatprep.subr.mxu0 0.0
    %751 = vmatpush1.msra.mxu0 %v288
    %752 = vmatprep.subr.mxu0 0.0
    %753 = vmatpush1.msra.mxu0 %v287
    %754 = vmatprep.subr.mxu0 0.0
    %755 = vmatpush1.msra.mxu0 %v286
    %756 = vmatprep.subr.mxu0 0.0
    %757 = vmatpush1.msra.mxu0 %v285
    %758 = vmatprep.subr.mxu0 0.0
    %759 = vmatpush1.msra.mxu0 %v284
    %760 = vmatprep.subr.mxu0 0.0
    %761 = vmatpush1.msra.mxu0 %v283
    %762 = vmatprep.subr.mxu0 0.0
    %763 = vmatpush1.msra.mxu0 %v282
    %764 = vmatprep.subr.mxu0 0.0
    %765 = vmatpush1.msra.mxu0 %v281
    %766 = vmatprep.subr.mxu0 0.0
    %767 = vmatpush1.msra.mxu0 %v280
    %768 = vmatprep.subr.mxu0 0.0
    %769 = vmatpush1.msra.mxu0 %v279
    %770 = vmatprep.subr.mxu0 0.0
    %771 = vmatpush1.msra.mxu0 %v278
    %772 = vmatprep.subr.mxu0 0.0
    %773 = vmatpush2.msra.mxu0 0.0
    %774 = vmatprep.subr.mxu0 0.0
    %775 = vmatpush2.msra.mxu0 0.0
    %776 = vmatprep.subr.mxu0 0.0
    %777 = vmatpush2.msra.mxu0 0.0
    %778 = vmatprep.subr.mxu0 0.0
    %779 = vmatpush2.msra.mxu0 0.0
    %780 = vmatprep.subr.mxu0 0.0
    %781 = vmatpush2.msra.mxu0 0.0
    %782 = vmatprep.subr.mxu0 0.0
    %783 = vmatpush2.msra.mxu0 0.0
    %784 = vmatprep.subr.mxu0 0.0
    %785 = vmatpush2.msra.mxu0 0.0
    %786 = vmatprep.subr.mxu0 0.0
    %787 = vmatpush2.msra.mxu0 0.0
    %788 = vmatprep.subr.mxu0 0.0
    %789 = vmatpush2.msra.mxu0 0.0
    %790 = vmatprep.subr.mxu0 0.0
    %791 = vmatpush2.msra.mxu0 0.0
    %792 = vmatprep.subr.mxu0 0.0
    %793 = vmatpush2.msra.mxu0 0.0
    %794 = vmatprep.subr.mxu0 0.0
    %795 = vmatpush2.msra.mxu0 0.0
    %796 = vmatprep.subr.mxu0 0.0
    %797 = vmatpush2.msra.mxu0 0.0
    %798 = vmatprep.subr.mxu0 0.0
    %799 = vmatpush2.msra.mxu0 0.0
    %800 = vmatprep.subr.mxu0 0.0
    %801 = vmatpush2.msra.mxu0 0.0
    %802 = vmatprep.subr.mxu0 0.0
    %803 = vmatpush2.msra.mxu0 0.0
    %804 = vmatprep.mubr.f32.mxu0 0.0
    %805 = vmatmul.mubr.f32.gmra.mxu0 %v736
    %v806 = vpop.f32.mrf.mxu0
    %v807 = vadd.f32 %v739, %v806
    %v808 = vpop.f32.mrf.mxu0
    %809 = vdwg.mxu0
    %v810 = vtanh.pop %v807
    %811 = vst [vmem:[%s738] sm:$0xff] %v810
    %s812 = scalar_lea.vmem [#allocation2], 56
    %v813 = vld [vmem:[%s812] sm:$0xff]
    %814 = vmatprep.subr.mxu0 0.0
    %815 = vmatpush1.msra.mxu0 %v293
    %816 = vmatprep.subr.mxu0 0.0
    %817 = vmatpush1.msra.mxu0 %v292
    %818 = vmatprep.subr.mxu0 0.0
    %819 = vmatpush1.msra.mxu0 %v291
    %820 = vmatprep.subr.mxu0 0.0
    %821 = vmatpush1.msra.mxu0 %v290
    %822 = vmatprep.subr.mxu0 0.0
    %823 = vmatpush1.msra.mxu0 %v289
    %824 = vmatprep.subr.mxu0 0.0
    %825 = vmatpush1.msra.mxu0 %v288
    %826 = vmatprep.subr.mxu0 0.0
    %827 = vmatpush1.msra.mxu0 %v287
    %828 = vmatprep.subr.mxu0 0.0
    %829 = vmatpush1.msra.mxu0 %v286
    %830 = vmatprep.subr.mxu0 0.0
    %831 = vmatpush1.msra.mxu0 %v285
    %832 = vmatprep.subr.mxu0 0.0
    %833 = vmatpush1.msra.mxu0 %v284
    %834 = vmatprep.subr.mxu0 0.0
    %835 = vmatpush1.msra.mxu0 %v283
    %836 = vmatprep.subr.mxu0 0.0
    %837 = vmatpush1.msra.mxu0 %v282
    %838 = vmatprep.subr.mxu0 0.0
    %839 = vmatpush1.msra.mxu0 %v281
    %840 = vmatprep.subr.mxu0 0.0
    %841 = vmatpush1.msra.mxu0 %v280
    %842 = vmatprep.subr.mxu0 0.0
    %843 = vmatpush1.msra.mxu0 %v279
    %844 = vmatprep.subr.mxu0 0.0
    %845 = vmatpush1.msra.mxu0 %v278
    %846 = vmatprep.subr.mxu0 0.0
    %847 = vmatpush2.msra.mxu0 0.0
    %848 = vmatprep.subr.mxu0 0.0
    %849 = vmatpush2.msra.mxu0 0.0
    %850 = vmatprep.subr.mxu0 0.0
    %851 = vmatpush2.msra.mxu0 0.0
    %852 = vmatprep.subr.mxu0 0.0
    %853 = vmatpush2.msra.mxu0 0.0
    %854 = vmatprep.subr.mxu0 0.0
    %855 = vmatpush2.msra.mxu0 0.0
    %856 = vmatprep.subr.mxu0 0.0
    %857 = vmatpush2.msra.mxu0 0.0
    %858 = vmatprep.subr.mxu0 0.0
    %859 = vmatpush2.msra.mxu0 0.0
    %860 = vmatprep.subr.mxu0 0.0
    %861 = vmatpush2.msra.mxu0 0.0
    %862 = vmatprep.subr.mxu0 0.0
    %863 = vmatpush2.msra.mxu0 0.0
    %864 = vmatprep.subr.mxu0 0.0
    %865 = vmatpush2.msra.mxu0 0.0
    %866 = vmatprep.subr.mxu0 0.0
    %867 = vmatpush2.msra.mxu0 0.0
    %868 = vmatprep.subr.mxu0 0.0
    %869 = vmatpush2.msra.mxu0 0.0
    %870 = vmatprep.subr.mxu0 0.0
    %871 = vmatpush2.msra.mxu0 0.0
    %872 = vmatprep.subr.mxu0 0.0
    %873 = vmatpush2.msra.mxu0 0.0
    %874 = vmatprep.subr.mxu0 0.0
    %875 = vmatpush2.msra.mxu0 0.0
    %876 = vmatprep.subr.mxu0 0.0
    %877 = vmatpush2.msra.mxu0 0.0
    %878 = vmatprep.mubr.f32.mxu0 0.0
    %879 = vmatmul.mubr.f32.gmra.mxu0 %v810
    %v880 = vpop.f32.mrf.mxu0
    %v881 = vadd.f32 %v813, %v880
    %v882 = vpop.f32.mrf.mxu0
    %883 = vdwg.mxu0
    %v884 = vtanh.pop %v881
    %885 = vst [vmem:[%s812] sm:$0xff] %v884
    %886 = vst [vmem:[#allocation16] sm:$0xff] %v884
    %v887 = vld [vmem:[#allocation2] sm:$0xff]
    %v888 = vld [vmem:[#allocation2 + $0x8] sm:$0xff]
    %v889 = vld [vmem:[#allocation2 + $0x10] sm:$0xff]
    %v890 = vld [vmem:[#allocation2 + $0x18] sm:$0xff]
    %v891 = vld [vmem:[#allocation2 + $0x20] sm:$0xff]
    %v892 = vld [vmem:[#allocation2 + $0x28] sm:$0xff]
    %v893 = vld [vmem:[#allocation2 + $0x30] sm:$0xff]
    %v894 = vld [vmem:[#allocation2 + $0x38] sm:$0xff]
    %v895 = vld [vmem:[#allocation11] sm:$0xff]
    %v896 = vld [vmem:[#allocation11 + $0x8] sm:$0xff]
    %v897 = vld [vmem:[#allocation11 + $0x10] sm:$0xff]
    %v898 = vld [vmem:[#allocation11 + $0x18] sm:$0xff]
    %v899 = vld [vmem:[#allocation11 + $0x20] sm:$0xff]
    %v900 = vld [vmem:[#allocation11 + $0x28] sm:$0xff]
    %v901 = vld [vmem:[#allocation11 + $0x30] sm:$0xff]
    %v902 = vld [vmem:[#allocation11 + $0x38] sm:$0xff]
    %v903 = vld [vmem:[#allocation11 + $0x40] sm:$0xff]
    %v904 = vld [vmem:[#allocation11 + $0x48] sm:$0xff]
    %v905 = vld [vmem:[#allocation11 + $0x50] sm:$0xff]
    %v906 = vld [vmem:[#allocation11 + $0x58] sm:$0xff]
    %v907 = vld [vmem:[#allocation11 + $0x60] sm:$0xff]
    %v908 = vld [vmem:[#allocation11 + $0x68] sm:$0xff]
    %v909 = vld [vmem:[#allocation11 + $0x70] sm:$0xff]
    %v910 = vld [vmem:[#allocation11 + $0x78] sm:$0xff]
    %v911 = vld [vmem:[%s7] sm:$0x1]
    %v913 = vlaneseq
    %v914 = vshrl.u32 %v913, 7
    %v915 = vsub.s32 0, %v914
    %v916 = vrot.slane %v911, %v915
    %918 = vmatprep.subr.mxu0 0.0
    %919 = vmatpush1.msra.mxu0 %v910
    %920 = vmatprep.subr.mxu0 0.0
    %921 = vmatpush1.msra.mxu0 %v909
    %922 = vmatprep.subr.mxu0 0.0
    %923 = vmatpush1.msra.mxu0 %v908
    %924 = vmatprep.subr.mxu0 0.0
    %925 = vmatpush1.msra.mxu0 %v907
    %926 = vmatprep.subr.mxu0 0.0
    %927 = vmatpush1.msra.mxu0 %v906
    %928 = vmatprep.subr.mxu0 0.0
    %929 = vmatpush1.msra.mxu0 %v905
    %930 = vmatprep.subr.mxu0 0.0
    %931 = vmatpush1.msra.mxu0 %v904
    %932 = vmatprep.subr.mxu0 0.0
    %933 = vmatpush1.msra.mxu0 %v903
    %934 = vmatprep.subr.mxu0 0.0
    %935 = vmatpush1.msra.mxu0 %v902
    %936 = vmatprep.subr.mxu0 0.0
    %937 = vmatpush1.msra.mxu0 %v901
    %938 = vmatprep.subr.mxu0 0.0
    %939 = vmatpush1.msra.mxu0 %v900
    %940 = vmatprep.subr.mxu0 0.0
    %941 = vmatpush1.msra.mxu0 %v899
    %942 = vmatprep.subr.mxu0 0.0
    %943 = vmatpush1.msra.mxu0 %v898
    %944 = vmatprep.subr.mxu0 0.0
    %945 = vmatpush1.msra.mxu0 %v897
    %946 = vmatprep.subr.mxu0 0.0
    %947 = vmatpush1.msra.mxu0 %v896
    %948 = vmatprep.subr.mxu0 0.0
    %949 = vmatpush1.msra.mxu0 %v895
    %950 = vmatprep.subr.mxu0 0.0
    %951 = vmatpush2.msra.mxu0 0.0
    %952 = vmatprep.subr.mxu0 0.0
    %953 = vmatpush2.msra.mxu0 0.0
    %954 = vmatprep.subr.mxu0 0.0
    %955 = vmatpush2.msra.mxu0 0.0
    %956 = vmatprep.subr.mxu0 0.0
    %957 = vmatpush2.msra.mxu0 0.0
    %958 = vmatprep.subr.mxu0 0.0
    %959 = vmatpush2.msra.mxu0 0.0
    %960 = vmatprep.subr.mxu0 0.0
    %961 = vmatpush2.msra.mxu0 0.0
    %962 = vmatprep.subr.mxu0 0.0
    %963 = vmatpush2.msra.mxu0 0.0
    %964 = vmatprep.subr.mxu0 0.0
    %965 = vmatpush2.msra.mxu0 0.0
    %966 = vmatprep.subr.mxu0 0.0
    %967 = vmatpush2.msra.mxu0 0.0
    %968 = vmatprep.subr.mxu0 0.0
    %969 = vmatpush2.msra.mxu0 0.0
    %970 = vmatprep.subr.mxu0 0.0
    %971 = vmatpush2.msra.mxu0 0.0
    %972 = vmatprep.subr.mxu0 0.0
    %973 = vmatpush2.msra.mxu0 0.0
    %974 = vmatprep.subr.mxu0 0.0
    %975 = vmatpush2.msra.mxu0 0.0
    %976 = vmatprep.subr.mxu0 0.0
    %977 = vmatpush2.msra.mxu0 0.0
    %978 = vmatprep.subr.mxu0 0.0
    %979 = vmatpush2.msra.mxu0 0.0
    %980 = vmatprep.subr.mxu0 0.0
    %981 = vmatpush2.msra.mxu0 0.0
    %982 = vmatprep.mubr.f32.mxu0 0.0
    %983 = vmatmul.mubr.f32.gmra.mxu0 %v887
    %v984 = vpop.f32.mrf.mxu0
    %v985 = vadd.f32 %v916, %v984
    %v986 = vpop.f32.mrf.mxu0
    %987 = vmatprep.mubr.f32.mxu0 0.0
    %988 = vmatmul.mubr.f32.gmra.mxu0 %v888
    %v989 = vpop.f32.mrf.mxu0
    %v990 = vadd.f32 %v916, %v989
    %v991 = vpop.f32.mrf.mxu0
    %992 = vmatprep.mubr.f32.mxu0 0.0
    %993 = vmatmul.mubr.f32.gmra.mxu0 %v889
    %v994 = vpop.f32.mrf.mxu0
    %v995 = vadd.f32 %v916, %v994
    %v996 = vpop.f32.mrf.mxu0
    %997 = vmatprep.mubr.f32.mxu0 0.0
    %998 = vmatmul.mubr.f32.gmra.mxu0 %v890
    %v999 = vpop.f32.mrf.mxu0
    %v1000 = vadd.f32 %v916, %v999
    %v1001 = vpop.f32.mrf.mxu0
    %1002 = vmatprep.mubr.f32.mxu0 0.0
    %1003 = vmatmul.mubr.f32.gmra.mxu0 %v891
    %v1004 = vpop.f32.mrf.mxu0
    %v1005 = vadd.f32 %v916, %v1004
    %v1006 = vpop.f32.mrf.mxu0
    %1007 = vmatprep.mubr.f32.mxu0 0.0
    %1008 = vmatmul.mubr.f32.gmra.mxu0 %v892
    %v1009 = vpop.f32.mrf.mxu0
    %v1010 = vadd.f32 %v916, %v1009
    %v1011 = vpop.f32.mrf.mxu0
    %1012 = vmatprep.mubr.f32.mxu0 0.0
    %1013 = vmatmul.mubr.f32.gmra.mxu0 %v893
    %v1014 = vpop.f32.mrf.mxu0
    %v1015 = vadd.f32 %v916, %v1014
    %v1016 = vpop.f32.mrf.mxu0
    %1017 = vmatprep.mubr.f32.mxu0 0.0
    %1018 = vmatmul.mubr.f32.gmra.mxu0 %v894
    %v1019 = vpop.f32.mrf.mxu0
    %v1020 = vadd.f32 %v916, %v1019
    %v1021 = vpop.f32.mrf.mxu0
    %1022 = vdwg.mxu0
    %1023 = vst [vmem:[#allocation2] sm:$0xff] %v985
    %1024 = vst [vmem:[#allocation2 + $0x8] sm:$0xff] %v990
    %1025 = vst [vmem:[#allocation2 + $0x10] sm:$0xff] %v995
    %1026 = vst [vmem:[#allocation2 + $0x18] sm:$0xff] %v1000
    %1027 = vst [vmem:[#allocation2 + $0x20] sm:$0xff] %v1005
    %1028 = vst [vmem:[#allocation2 + $0x28] sm:$0xff] %v1010
    %1029 = vst [vmem:[#allocation2 + $0x30] sm:$0xff] %v1015
    %1030 = vst [vmem:[#allocation2 + $0x38] sm:$0xff] %v1020
    %v1031 = vld [vmem:[#allocation12] sm:$0xff]
    %v1032 = vld [vmem:[#allocation12 + $0x8] sm:$0xff]
    %v1033 = vld [vmem:[#allocation12 + $0x10] sm:$0xff]
    %v1034 = vld [vmem:[#allocation12 + $0x18] sm:$0xff]
    %v1035 = vld [vmem:[#allocation12 + $0x20] sm:$0xff]
    %v1036 = vld [vmem:[#allocation12 + $0x28] sm:$0xff]
    %v1037 = vld [vmem:[#allocation12 + $0x30] sm:$0xff]
    %v1038 = vld [vmem:[#allocation12 + $0x38] sm:$0xff]
    %v1039 = vld [vmem:[#allocation12 + $0x40] sm:$0xff]
    %v1040 = vld [vmem:[#allocation12 + $0x48] sm:$0xff]
    %v1041 = vld [vmem:[#allocation12 + $0x50] sm:$0xff]
    %v1042 = vld [vmem:[#allocation12 + $0x58] sm:$0xff]
    %v1043 = vld [vmem:[#allocation12 + $0x60] sm:$0xff]
    %v1044 = vld [vmem:[#allocation12 + $0x68] sm:$0xff]
    %v1045 = vld [vmem:[#allocation12 + $0x70] sm:$0xff]
    %v1046 = vld [vmem:[#allocation12 + $0x78] sm:$0xff]
    %s1047 = scalar_lea.vmem [#allocation6], 8
    %v1048 = vld [vmem:[%s1047] sm:$0xff]
    %v1049 = vld [vmem:[#allocation2] sm:$0xff]
    %1050 = vmatprep.subr.mxu0 0.0
    %1051 = vmatpush1.msra.mxu0 %v1046
    %1052 = vmatprep.subr.mxu0 0.0
    %1053 = vmatpush1.msra.mxu0 %v1045
    %1054 = vmatprep.subr.mxu0 0.0
    %1055 = vmatpush1.msra.mxu0 %v1044
    %1056 = vmatprep.subr.mxu0 0.0
    %1057 = vmatpush1.msra.mxu0 %v1043
    %1058 = vmatprep.subr.mxu0 0.0
    %1059 = vmatpush1.msra.mxu0 %v1042
    %1060 = vmatprep.subr.mxu0 0.0
    %1061 = vmatpush1.msra.mxu0 %v1041
    %1062 = vmatprep.subr.mxu0 0.0
    %1063 = vmatpush1.msra.mxu0 %v1040
    %1064 = vmatprep.subr.mxu0 0.0
    %1065 = vmatpush1.msra.mxu0 %v1039
    %1066 = vmatprep.subr.mxu0 0.0
    %1067 = vmatpush1.msra.mxu0 %v1038
    %1068 = vmatprep.subr.mxu0 0.0
    %1069 = vmatpush1.msra.mxu0 %v1037
    %1070 = vmatprep.subr.mxu0 0.0
    %1071 = vmatpush1.msra.mxu0 %v1036
    %1072 = vmatprep.subr.mxu0 0.0
    %1073 = vmatpush1.msra.mxu0 %v1035
    %1074 = vmatprep.subr.mxu0 0.0
    %1075 = vmatpush1.msra.mxu0 %v1034
    %1076 = vmatprep.subr.mxu0 0.0
    %1077 = vmatpush1.msra.mxu0 %v1033
    %1078 = vmatprep.subr.mxu0 0.0
    %1079 = vmatpush1.msra.mxu0 %v1032
    %1080 = vmatprep.subr.mxu0 0.0
    %1081 = vmatpush1.msra.mxu0 %v1031
    %1082 = vmatprep.subr.mxu0 0.0
    %1083 = vmatpush2.msra.mxu0 0.0
    %1084 = vmatprep.subr.mxu0 0.0
    %1085 = vmatpush2.msra.mxu0 0.0
    %1086 = vmatprep.subr.mxu0 0.0
    %1087 = vmatpush2.msra.mxu0 0.0
    %1088 = vmatprep.subr.mxu0 0.0
    %1089 = vmatpush2.msra.mxu0 0.0
    %1090 = vmatprep.subr.mxu0 0.0
    %1091 = vmatpush2.msra.mxu0 0.0
    %1092 = vmatprep.subr.mxu0 0.0
    %1093 = vmatpush2.msra.mxu0 0.0
    %1094 = vmatprep.subr.mxu0 0.0
    %1095 = vmatpush2.msra.mxu0 0.0
    %1096 = vmatprep.subr.mxu0 0.0
    %1097 = vmatpush2.msra.mxu0 0.0
    %1098 = vmatprep.subr.mxu0 0.0
    %1099 = vmatpush2.msra.mxu0 0.0
    %1100 = vmatprep.subr.mxu0 0.0
    %1101 = vmatpush2.msra.mxu0 0.0
    %1102 = vmatprep.subr.mxu0 0.0
    %1103 = vmatpush2.msra.mxu0 0.0
    %1104 = vmatprep.subr.mxu0 0.0
    %1105 = vmatpush2.msra.mxu0 0.0
    %1106 = vmatprep.subr.mxu0 0.0
    %1107 = vmatpush2.msra.mxu0 0.0
    %1108 = vmatprep.subr.mxu0 0.0
    %1109 = vmatpush2.msra.mxu0 0.0
    %1110 = vmatprep.subr.mxu0 0.0
    %1111 = vmatpush2.msra.mxu0 0.0
    %1112 = vmatprep.subr.mxu0 0.0
    %1113 = vmatpush2.msra.mxu0 0.0
    %1114 = vmatprep.mubr.f32.mxu0 0.0
    %1115 = vmatmul.mubr.f32.gmra.mxu0 %v1048
    %v1116 = vpop.f32.mrf.mxu0
    %v1117 = vadd.f32 %v1049, %v1116
    %v1118 = vpop.f32.mrf.mxu0
    %1119 = vdwg.mxu0
    %v1120 = vtanh.pop %v1117
    %1121 = vst [vmem:[#allocation2] sm:$0xff] %v1120
    %v1122 = vld [vmem:[%s368] sm:$0xff]
    %1123 = vmatprep.subr.mxu0 0.0
    %1124 = vmatpush1.msra.mxu0 %v1046
    %1125 = vmatprep.subr.mxu0 0.0
    %1126 = vmatpush1.msra.mxu0 %v1045
    %1127 = vmatprep.subr.mxu0 0.0
    %1128 = vmatpush1.msra.mxu0 %v1044
    %1129 = vmatprep.subr.mxu0 0.0
    %1130 = vmatpush1.msra.mxu0 %v1043
    %1131 = vmatprep.subr.mxu0 0.0
    %1132 = vmatpush1.msra.mxu0 %v1042
    %1133 = vmatprep.subr.mxu0 0.0
    %1134 = vmatpush1.msra.mxu0 %v1041
    %1135 = vmatprep.subr.mxu0 0.0
    %1136 = vmatpush1.msra.mxu0 %v1040
    %1137 = vmatprep.subr.mxu0 0.0
    %1138 = vmatpush1.msra.mxu0 %v1039
    %1139 = vmatprep.subr.mxu0 0.0
    %1140 = vmatpush1.msra.mxu0 %v1038
    %1141 = vmatprep.subr.mxu0 0.0
    %1142 = vmatpush1.msra.mxu0 %v1037
    %1143 = vmatprep.subr.mxu0 0.0
    %1144 = vmatpush1.msra.mxu0 %v1036
    %1145 = vmatprep.subr.mxu0 0.0
    %1146 = vmatpush1.msra.mxu0 %v1035
    %1147 = vmatprep.subr.mxu0 0.0
    %1148 = vmatpush1.msra.mxu0 %v1034
    %1149 = vmatprep.subr.mxu0 0.0
    %1150 = vmatpush1.msra.mxu0 %v1033
    %1151 = vmatprep.subr.mxu0 0.0
    %1152 = vmatpush1.msra.mxu0 %v1032
    %1153 = vmatprep.subr.mxu0 0.0
    %1154 = vmatpush1.msra.mxu0 %v1031
    %1155 = vmatprep.subr.mxu0 0.0
    %1156 = vmatpush2.msra.mxu0 0.0
    %1157 = vmatprep.subr.mxu0 0.0
    %1158 = vmatpush2.msra.mxu0 0.0
    %1159 = vmatprep.subr.mxu0 0.0
    %1160 = vmatpush2.msra.mxu0 0.0
    %1161 = vmatprep.subr.mxu0 0.0
    %1162 = vmatpush2.msra.mxu0 0.0
    %1163 = vmatprep.subr.mxu0 0.0
    %1164 = vmatpush2.msra.mxu0 0.0
    %1165 = vmatprep.subr.mxu0 0.0
    %1166 = vmatpush2.msra.mxu0 0.0
    %1167 = vmatprep.subr.mxu0 0.0
    %1168 = vmatpush2.msra.mxu0 0.0
    %1169 = vmatprep.subr.mxu0 0.0
    %1170 = vmatpush2.msra.mxu0 0.0
    %1171 = vmatprep.subr.mxu0 0.0
    %1172 = vmatpush2.msra.mxu0 0.0
    %1173 = vmatprep.subr.mxu0 0.0
    %1174 = vmatpush2.msra.mxu0 0.0
    %1175 = vmatprep.subr.mxu0 0.0
    %1176 = vmatpush2.msra.mxu0 0.0
    %1177 = vmatprep.subr.mxu0 0.0
    %1178 = vmatpush2.msra.mxu0 0.0
    %1179 = vmatprep.subr.mxu0 0.0
    %1180 = vmatpush2.msra.mxu0 0.0
    %1181 = vmatprep.subr.mxu0 0.0
    %1182 = vmatpush2.msra.mxu0 0.0
    %1183 = vmatprep.subr.mxu0 0.0
    %1184 = vmatpush2.msra.mxu0 0.0
    %1185 = vmatprep.subr.mxu0 0.0
    %1186 = vmatpush2.msra.mxu0 0.0
    %1187 = vmatprep.mubr.f32.mxu0 0.0
    %1188 = vmatmul.mubr.f32.gmra.mxu0 %v1120
    %v1189 = vpop.f32.mrf.mxu0
    %v1190 = vadd.f32 %v1122, %v1189
    %v1191 = vpop.f32.mrf.mxu0
    %1192 = vdwg.mxu0
    %v1193 = vtanh.pop %v1190
    %1194 = vst [vmem:[%s368] sm:$0xff] %v1193
    %v1195 = vld [vmem:[%s442] sm:$0xff]
    %1196 = vmatprep.subr.mxu0 0.0
    %1197 = vmatpush1.msra.mxu0 %v1046
    %1198 = vmatprep.subr.mxu0 0.0
    %1199 = vmatpush1.msra.mxu0 %v1045
    %1200 = vmatprep.subr.mxu0 0.0
    %1201 = vmatpush1.msra.mxu0 %v1044
    %1202 = vmatprep.subr.mxu0 0.0
    %1203 = vmatpush1.msra.mxu0 %v1043
    %1204 = vmatprep.subr.mxu0 0.0
    %1205 = vmatpush1.msra.mxu0 %v1042
    %1206 = vmatprep.subr.mxu0 0.0
    %1207 = vmatpush1.msra.mxu0 %v1041
    %1208 = vmatprep.subr.mxu0 0.0
    %1209 = vmatpush1.msra.mxu0 %v1040
    %1210 = vmatprep.subr.mxu0 0.0
    %1211 = vmatpush1.msra.mxu0 %v1039
    %1212 = vmatprep.subr.mxu0 0.0
    %1213 = vmatpush1.msra.mxu0 %v1038
    %1214 = vmatprep.subr.mxu0 0.0
    %1215 = vmatpush1.msra.mxu0 %v1037
    %1216 = vmatprep.subr.mxu0 0.0
    %1217 = vmatpush1.msra.mxu0 %v1036
    %1218 = vmatprep.subr.mxu0 0.0
    %1219 = vmatpush1.msra.mxu0 %v1035
    %1220 = vmatprep.subr.mxu0 0.0
    %1221 = vmatpush1.msra.mxu0 %v1034
    %1222 = vmatprep.subr.mxu0 0.0
    %1223 = vmatpush1.msra.mxu0 %v1033
    %1224 = vmatprep.subr.mxu0 0.0
    %1225 = vmatpush1.msra.mxu0 %v1032
    %1226 = vmatprep.subr.mxu0 0.0
    %1227 = vmatpush1.msra.mxu0 %v1031
    %1228 = vmatprep.subr.mxu0 0.0
    %1229 = vmatpush2.msra.mxu0 0.0
    %1230 = vmatprep.subr.mxu0 0.0
    %1231 = vmatpush2.msra.mxu0 0.0
    %1232 = vmatprep.subr.mxu0 0.0
    %1233 = vmatpush2.msra.mxu0 0.0
    %1234 = vmatprep.subr.mxu0 0.0
    %1235 = vmatpush2.msra.mxu0 0.0
    %1236 = vmatprep.subr.mxu0 0.0
    %1237 = vmatpush2.msra.mxu0 0.0
    %1238 = vmatprep.subr.mxu0 0.0
    %1239 = vmatpush2.msra.mxu0 0.0
    %1240 = vmatprep.subr.mxu0 0.0
    %1241 = vmatpush2.msra.mxu0 0.0
    %1242 = vmatprep.subr.mxu0 0.0
    %1243 = vmatpush2.msra.mxu0 0.0
    %1244 = vmatprep.subr.mxu0 0.0
    %1245 = vmatpush2.msra.mxu0 0.0
    %1246 = vmatprep.subr.mxu0 0.0
    %1247 = vmatpush2.msra.mxu0 0.0
    %1248 = vmatprep.subr.mxu0 0.0
    %1249 = vmatpush2.msra.mxu0 0.0
    %1250 = vmatprep.subr.mxu0 0.0
    %1251 = vmatpush2.msra.mxu0 0.0
    %1252 = vmatprep.subr.mxu0 0.0
    %1253 = vmatpush2.msra.mxu0 0.0
    %1254 = vmatprep.subr.mxu0 0.0
    %1255 = vmatpush2.msra.mxu0 0.0
    %1256 = vmatprep.subr.mxu0 0.0
    %1257 = vmatpush2.msra.mxu0 0.0
    %1258 = vmatprep.subr.mxu0 0.0
    %1259 = vmatpush2.msra.mxu0 0.0
    %1260 = vmatprep.mubr.f32.mxu0 0.0
    %1261 = vmatmul.mubr.f32.gmra.mxu0 %v1193
    %v1262 = vpop.f32.mrf.mxu0
    %v1263 = vadd.f32 %v1195, %v1262
    %v1264 = vpop.f32.mrf.mxu0
    %1265 = vdwg.mxu0
    %v1266 = vtanh.pop %v1263
    %1267 = vst [vmem:[%s442] sm:$0xff] %v1266
    %v1268 = vld [vmem:[%s516] sm:$0xff]
    %1269 = vmatprep.subr.mxu0 0.0
    %1270 = vmatpush1.msra.mxu0 %v1046
    %1271 = vmatprep.subr.mxu0 0.0
    %1272 = vmatpush1.msra.mxu0 %v1045
    %1273 = vmatprep.subr.mxu0 0.0
    %1274 = vmatpush1.msra.mxu0 %v1044
    %1275 = vmatprep.subr.mxu0 0.0
    %1276 = vmatpush1.msra.mxu0 %v1043
    %1277 = vmatprep.subr.mxu0 0.0
    %1278 = vmatpush1.msra.mxu0 %v1042
    %1279 = vmatprep.subr.mxu0 0.0
    %1280 = vmatpush1.msra.mxu0 %v1041
    %1281 = vmatprep.subr.mxu0 0.0
    %1282 = vmatpush1.msra.mxu0 %v1040
    %1283 = vmatprep.subr.mxu0 0.0
    %1284 = vmatpush1.msra.mxu0 %v1039
    %1285 = vmatprep.subr.mxu0 0.0
    %1286 = vmatpush1.msra.mxu0 %v1038
    %1287 = vmatprep.subr.mxu0 0.0
    %1288 = vmatpush1.msra.mxu0 %v1037
    %1289 = vmatprep.subr.mxu0 0.0
    %1290 = vmatpush1.msra.mxu0 %v1036
    %1291 = vmatprep.subr.mxu0 0.0
    %1292 = vmatpush1.msra.mxu0 %v1035
    %1293 = vmatprep.subr.mxu0 0.0
    %1294 = vmatpush1.msra.mxu0 %v1034
    %1295 = vmatprep.subr.mxu0 0.0
    %1296 = vmatpush1.msra.mxu0 %v1033
    %1297 = vmatprep.subr.mxu0 0.0
    %1298 = vmatpush1.msra.mxu0 %v1032
    %1299 = vmatprep.subr.mxu0 0.0
    %1300 = vmatpush1.msra.mxu0 %v1031
    %1301 = vmatprep.subr.mxu0 0.0
    %1302 = vmatpush2.msra.mxu0 0.0
    %1303 = vmatprep.subr.mxu0 0.0
    %1304 = vmatpush2.msra.mxu0 0.0
    %1305 = vmatprep.subr.mxu0 0.0
    %1306 = vmatpush2.msra.mxu0 0.0
    %1307 = vmatprep.subr.mxu0 0.0
    %1308 = vmatpush2.msra.mxu0 0.0
    %1309 = vmatprep.subr.mxu0 0.0
    %1310 = vmatpush2.msra.mxu0 0.0
    %1311 = vmatprep.subr.mxu0 0.0
    %1312 = vmatpush2.msra.mxu0 0.0
    %1313 = vmatprep.subr.mxu0 0.0
    %1314 = vmatpush2.msra.mxu0 0.0
    %1315 = vmatprep.subr.mxu0 0.0
    %1316 = vmatpush2.msra.mxu0 0.0
    %1317 = vmatprep.subr.mxu0 0.0
    %1318 = vmatpush2.msra.mxu0 0.0
    %1319 = vmatprep.subr.mxu0 0.0
    %1320 = vmatpush2.msra.mxu0 0.0
    %1321 = vmatprep.subr.mxu0 0.0
    %1322 = vmatpush2.msra.mxu0 0.0
    %1323 = vmatprep.subr.mxu0 0.0
    %1324 = vmatpush2.msra.mxu0 0.0
    %1325 = vmatprep.subr.mxu0 0.0
    %1326 = vmatpush2.msra.mxu0 0.0
    %1327 = vmatprep.subr.mxu0 0.0
    %1328 = vmatpush2.msra.mxu0 0.0
    %1329 = vmatprep.subr.mxu0 0.0
    %1330 = vmatpush2.msra.mxu0 0.0
    %1331 = vmatprep.subr.mxu0 0.0
    %1332 = vmatpush2.msra.mxu0 0.0
    %1333 = vmatprep.mubr.f32.mxu0 0.0
    %1334 = vmatmul.mubr.f32.gmra.mxu0 %v1266
    %v1335 = vpop.f32.mrf.mxu0
    %v1336 = vadd.f32 %v1268, %v1335
    %v1337 = vpop.f32.mrf.mxu0
    %1338 = vdwg.mxu0
    %v1339 = vtanh.pop %v1336
    %1340 = vst [vmem:[%s516] sm:$0xff] %v1339
    %v1341 = vld [vmem:[%s590] sm:$0xff]
    %1342 = vmatprep.subr.mxu0 0.0
    %1343 = vmatpush1.msra.mxu0 %v1046
    %1344 = vmatprep.subr.mxu0 0.0
    %1345 = vmatpush1.msra.mxu0 %v1045
    %1346 = vmatprep.subr.mxu0 0.0
    %1347 = vmatpush1.msra.mxu0 %v1044
    %1348 = vmatprep.subr.mxu0 0.0
    %1349 = vmatpush1.msra.mxu0 %v1043
    %1350 = vmatprep.subr.mxu0 0.0
    %1351 = vmatpush1.msra.mxu0 %v1042
    %1352 = vmatprep.subr.mxu0 0.0
    %1353 = vmatpush1.msra.mxu0 %v1041
    %1354 = vmatprep.subr.mxu0 0.0
    %1355 = vmatpush1.msra.mxu0 %v1040
    %1356 = vmatprep.subr.mxu0 0.0
    %1357 = vmatpush1.msra.mxu0 %v1039
    %1358 = vmatprep.subr.mxu0 0.0
    %1359 = vmatpush1.msra.mxu0 %v1038
    %1360 = vmatprep.subr.mxu0 0.0
    %1361 = vmatpush1.msra.mxu0 %v1037
    %1362 = vmatprep.subr.mxu0 0.0
    %1363 = vmatpush1.msra.mxu0 %v1036
    %1364 = vmatprep.subr.mxu0 0.0
    %1365 = vmatpush1.msra.mxu0 %v1035
    %1366 = vmatprep.subr.mxu0 0.0
    %1367 = vmatpush1.msra.mxu0 %v1034
    %1368 = vmatprep.subr.mxu0 0.0
    %1369 = vmatpush1.msra.mxu0 %v1033
    %1370 = vmatprep.subr.mxu0 0.0
    %1371 = vmatpush1.msra.mxu0 %v1032
    %1372 = vmatprep.subr.mxu0 0.0
    %1373 = vmatpush1.msra.mxu0 %v1031
    %1374 = vmatprep.subr.mxu0 0.0
    %1375 = vmatpush2.msra.mxu0 0.0
    %1376 = vmatprep.subr.mxu0 0.0
    %1377 = vmatpush2.msra.mxu0 0.0
    %1378 = vmatprep.subr.mxu0 0.0
    %1379 = vmatpush2.msra.mxu0 0.0
    %1380 = vmatprep.subr.mxu0 0.0
    %1381 = vmatpush2.msra.mxu0 0.0
    %1382 = vmatprep.subr.mxu0 0.0
    %1383 = vmatpush2.msra.mxu0 0.0
    %1384 = vmatprep.subr.mxu0 0.0
    %1385 = vmatpush2.msra.mxu0 0.0
    %1386 = vmatprep.subr.mxu0 0.0
    %1387 = vmatpush2.msra.mxu0 0.0
    %1388 = vmatprep.subr.mxu0 0.0
    %1389 = vmatpush2.msra.mxu0 0.0
    %1390 = vmatprep.subr.mxu0 0.0
    %1391 = vmatpush2.msra.mxu0 0.0
    %1392 = vmatprep.subr.mxu0 0.0
    %1393 = vmatpush2.msra.mxu0 0.0
    %1394 = vmatprep.subr.mxu0 0.0
    %1395 = vmatpush2.msra.mxu0 0.0
    %1396 = vmatprep.subr.mxu0 0.0
    %1397 = vmatpush2.msra.mxu0 0.0
    %1398 = vmatprep.subr.mxu0 0.0
    %1399 = vmatpush2.msra.mxu0 0.0
    %1400 = vmatprep.subr.mxu0 0.0
    %1401 = vmatpush2.msra.mxu0 0.0
    %1402 = vmatprep.subr.mxu0 0.0
    %1403 = vmatpush2.msra.mxu0 0.0
    %1404 = vmatprep.subr.mxu0 0.0
    %1405 = vmatpush2.msra.mxu0 0.0
    %1406 = vmatprep.mubr.f32.mxu0 0.0
    %1407 = vmatmul.mubr.f32.gmra.mxu0 %v1339
    %v1408 = vpop.f32.mrf.mxu0
    %v1409 = vadd.f32 %v1341, %v1408
    %v1410 = vpop.f32.mrf.mxu0
    %1411 = vdwg.mxu0
    %v1412 = vtanh.pop %v1409
    %1413 = vst [vmem:[%s590] sm:$0xff] %v1412
    %v1414 = vld [vmem:[%s664] sm:$0xff]
    %1415 = vmatprep.subr.mxu0 0.0
    %1416 = vmatpush1.msra.mxu0 %v1046
    %1417 = vmatprep.subr.mxu0 0.0
    %1418 = vmatpush1.msra.mxu0 %v1045
    %1419 = vmatprep.subr.mxu0 0.0
    %1420 = vmatpush1.msra.mxu0 %v1044
    %1421 = vmatprep.subr.mxu0 0.0
    %1422 = vmatpush1.msra.mxu0 %v1043
    %1423 = vmatprep.subr.mxu0 0.0
    %1424 = vmatpush1.msra.mxu0 %v1042
    %1425 = vmatprep.subr.mxu0 0.0
    %1426 = vmatpush1.msra.mxu0 %v1041
    %1427 = vmatprep.subr.mxu0 0.0
    %1428 = vmatpush1.msra.mxu0 %v1040
    %1429 = vmatprep.subr.mxu0 0.0
    %1430 = vmatpush1.msra.mxu0 %v1039
    %1431 = vmatprep.subr.mxu0 0.0
    %1432 = vmatpush1.msra.mxu0 %v1038
    %1433 = vmatprep.subr.mxu0 0.0
    %1434 = vmatpush1.msra.mxu0 %v1037
    %1435 = vmatprep.subr.mxu0 0.0
    %1436 = vmatpush1.msra.mxu0 %v1036
    %1437 = vmatprep.subr.mxu0 0.0
    %1438 = vmatpush1.msra.mxu0 %v1035
    %1439 = vmatprep.subr.mxu0 0.0
    %1440 = vmatpush1.msra.mxu0 %v1034
    %1441 = vmatprep.subr.mxu0 0.0
    %1442 = vmatpush1.msra.mxu0 %v1033
    %1443 = vmatprep.subr.mxu0 0.0
    %1444 = vmatpush1.msra.mxu0 %v1032
    %1445 = vmatprep.subr.mxu0 0.0
    %1446 = vmatpush1.msra.mxu0 %v1031
    %1447 = vmatprep.subr.mxu0 0.0
    %1448 = vmatpush2.msra.mxu0 0.0
    %1449 = vmatprep.subr.mxu0 0.0
    %1450 = vmatpush2.msra.mxu0 0.0
    %1451 = vmatprep.subr.mxu0 0.0
    %1452 = vmatpush2.msra.mxu0 0.0
    %1453 = vmatprep.subr.mxu0 0.0
    %1454 = vmatpush2.msra.mxu0 0.0
    %1455 = vmatprep.subr.mxu0 0.0
    %1456 = vmatpush2.msra.mxu0 0.0
    %1457 = vmatprep.subr.mxu0 0.0
    %1458 = vmatpush2.msra.mxu0 0.0
    %1459 = vmatprep.subr.mxu0 0.0
    %1460 = vmatpush2.msra.mxu0 0.0
    %1461 = vmatprep.subr.mxu0 0.0
    %1462 = vmatpush2.msra.mxu0 0.0
    %1463 = vmatprep.subr.mxu0 0.0
    %1464 = vmatpush2.msra.mxu0 0.0
    %1465 = vmatprep.subr.mxu0 0.0
    %1466 = vmatpush2.msra.mxu0 0.0
    %1467 = vmatprep.subr.mxu0 0.0
    %1468 = vmatpush2.msra.mxu0 0.0
    %1469 = vmatprep.subr.mxu0 0.0
    %1470 = vmatpush2.msra.mxu0 0.0
    %1471 = vmatprep.subr.mxu0 0.0
    %1472 = vmatpush2.msra.mxu0 0.0
    %1473 = vmatprep.subr.mxu0 0.0
    %1474 = vmatpush2.msra.mxu0 0.0
    %1475 = vmatprep.subr.mxu0 0.0
    %1476 = vmatpush2.msra.mxu0 0.0
    %1477 = vmatprep.subr.mxu0 0.0
    %1478 = vmatpush2.msra.mxu0 0.0
    %1479 = vmatprep.mubr.f32.mxu0 0.0
    %1480 = vmatmul.mubr.f32.gmra.mxu0 %v1412
    %v1481 = vpop.f32.mrf.mxu0
    %v1482 = vadd.f32 %v1414, %v1481
    %v1483 = vpop.f32.mrf.mxu0
    %1484 = vdwg.mxu0
    %v1485 = vtanh.pop %v1482
    %1486 = vst [vmem:[%s664] sm:$0xff] %v1485
    %v1487 = vld [vmem:[%s738] sm:$0xff]
    %1488 = vmatprep.subr.mxu0 0.0
    %1489 = vmatpush1.msra.mxu0 %v1046
    %1490 = vmatprep.subr.mxu0 0.0
    %1491 = vmatpush1.msra.mxu0 %v1045
    %1492 = vmatprep.subr.mxu0 0.0
    %1493 = vmatpush1.msra.mxu0 %v1044
    %1494 = vmatprep.subr.mxu0 0.0
    %1495 = vmatpush1.msra.mxu0 %v1043
    %1496 = vmatprep.subr.mxu0 0.0
    %1497 = vmatpush1.msra.mxu0 %v1042
    %1498 = vmatprep.subr.mxu0 0.0
    %1499 = vmatpush1.msra.mxu0 %v1041
    %1500 = vmatprep.subr.mxu0 0.0
    %1501 = vmatpush1.msra.mxu0 %v1040
    %1502 = vmatprep.subr.mxu0 0.0
    %1503 = vmatpush1.msra.mxu0 %v1039
    %1504 = vmatprep.subr.mxu0 0.0
    %1505 = vmatpush1.msra.mxu0 %v1038
    %1506 = vmatprep.subr.mxu0 0.0
    %1507 = vmatpush1.msra.mxu0 %v1037
    %1508 = vmatprep.subr.mxu0 0.0
    %1509 = vmatpush1.msra.mxu0 %v1036
    %1510 = vmatprep.subr.mxu0 0.0
    %1511 = vmatpush1.msra.mxu0 %v1035
    %1512 = vmatprep.subr.mxu0 0.0
    %1513 = vmatpush1.msra.mxu0 %v1034
    %1514 = vmatprep.subr.mxu0 0.0
    %1515 = vmatpush1.msra.mxu0 %v1033
    %1516 = vmatprep.subr.mxu0 0.0
    %1517 = vmatpush1.msra.mxu0 %v1032
    %1518 = vmatprep.subr.mxu0 0.0
    %1519 = vmatpush1.msra.mxu0 %v1031
    %1520 = vmatprep.subr.mxu0 0.0
    %1521 = vmatpush2.msra.mxu0 0.0
    %1522 = vmatprep.subr.mxu0 0.0
    %1523 = vmatpush2.msra.mxu0 0.0
    %1524 = vmatprep.subr.mxu0 0.0
    %1525 = vmatpush2.msra.mxu0 0.0
    %1526 = vmatprep.subr.mxu0 0.0
    %1527 = vmatpush2.msra.mxu0 0.0
    %1528 = vmatprep.subr.mxu0 0.0
    %1529 = vmatpush2.msra.mxu0 0.0
    %1530 = vmatprep.subr.mxu0 0.0
    %1531 = vmatpush2.msra.mxu0 0.0
    %1532 = vmatprep.subr.mxu0 0.0
    %1533 = vmatpush2.msra.mxu0 0.0
    %1534 = vmatprep.subr.mxu0 0.0
    %1535 = vmatpush2.msra.mxu0 0.0
    %1536 = vmatprep.subr.mxu0 0.0
    %1537 = vmatpush2.msra.mxu0 0.0
    %1538 = vmatprep.subr.mxu0 0.0
    %1539 = vmatpush2.msra.mxu0 0.0
    %1540 = vmatprep.subr.mxu0 0.0
    %1541 = vmatpush2.msra.mxu0 0.0
    %1542 = vmatprep.subr.mxu0 0.0
    %1543 = vmatpush2.msra.mxu0 0.0
    %1544 = vmatprep.subr.mxu0 0.0
    %1545 = vmatpush2.msra.mxu0 0.0
    %1546 = vmatprep.subr.mxu0 0.0
    %1547 = vmatpush2.msra.mxu0 0.0
    %1548 = vmatprep.subr.mxu0 0.0
    %1549 = vmatpush2.msra.mxu0 0.0
    %1550 = vmatprep.subr.mxu0 0.0
    %1551 = vmatpush2.msra.mxu0 0.0
    %1552 = vmatprep.mubr.f32.mxu0 0.0
    %1553 = vmatmul.mubr.f32.gmra.mxu0 %v1485
    %v1554 = vpop.f32.mrf.mxu0
    %v1555 = vadd.f32 %v1487, %v1554
    %v1556 = vpop.f32.mrf.mxu0
    %1557 = vdwg.mxu0
    %v1558 = vtanh.pop %v1555
    %1559 = vst [vmem:[%s738] sm:$0xff] %v1558
    %v1560 = vld [vmem:[%s812] sm:$0xff]
    %1561 = vmatprep.subr.mxu0 0.0
    %1562 = vmatpush1.msra.mxu0 %v1046
    %1563 = vmatprep.subr.mxu0 0.0
    %1564 = vmatpush1.msra.mxu0 %v1045
    %1565 = vmatprep.subr.mxu0 0.0
    %1566 = vmatpush1.msra.mxu0 %v1044
    %1567 = vmatprep.subr.mxu0 0.0
    %1568 = vmatpush1.msra.mxu0 %v1043
    %1569 = vmatprep.subr.mxu0 0.0
    %1570 = vmatpush1.msra.mxu0 %v1042
    %1571 = vmatprep.subr.mxu0 0.0
    %1572 = vmatpush1.msra.mxu0 %v1041
    %1573 = vmatprep.subr.mxu0 0.0
    %1574 = vmatpush1.msra.mxu0 %v1040
    %1575 = vmatprep.subr.mxu0 0.0
    %1576 = vmatpush1.msra.mxu0 %v1039
    %1577 = vmatprep.subr.mxu0 0.0
    %1578 = vmatpush1.msra.mxu0 %v1038
    %1579 = vmatprep.subr.mxu0 0.0
    %1580 = vmatpush1.msra.mxu0 %v1037
    %1581 = vmatprep.subr.mxu0 0.0
    %1582 = vmatpush1.msra.mxu0 %v1036
    %1583 = vmatprep.subr.mxu0 0.0
    %1584 = vmatpush1.msra.mxu0 %v1035
    %1585 = vmatprep.subr.mxu0 0.0
    %1586 = vmatpush1.msra.mxu0 %v1034
    %1587 = vmatprep.subr.mxu0 0.0
    %1588 = vmatpush1.msra.mxu0 %v1033
    %1589 = vmatprep.subr.mxu0 0.0
    %1590 = vmatpush1.msra.mxu0 %v1032
    %1591 = vmatprep.subr.mxu0 0.0
    %1592 = vmatpush1.msra.mxu0 %v1031
    %1593 = vmatprep.subr.mxu0 0.0
    %1594 = vmatpush2.msra.mxu0 0.0
    %1595 = vmatprep.subr.mxu0 0.0
    %1596 = vmatpush2.msra.mxu0 0.0
    %1597 = vmatprep.subr.mxu0 0.0
    %1598 = vmatpush2.msra.mxu0 0.0
    %1599 = vmatprep.subr.mxu0 0.0
    %1600 = vmatpush2.msra.mxu0 0.0
    %1601 = vmatprep.subr.mxu0 0.0
    %1602 = vmatpush2.msra.mxu0 0.0
    %1603 = vmatprep.subr.mxu0 0.0
    %1604 = vmatpush2.msra.mxu0 0.0
    %1605 = vmatprep.subr.mxu0 0.0
    %1606 = vmatpush2.msra.mxu0 0.0
    %1607 = vmatprep.subr.mxu0 0.0
    %1608 = vmatpush2.msra.mxu0 0.0
    %1609 = vmatprep.subr.mxu0 0.0
    %1610 = vmatpush2.msra.mxu0 0.0
    %1611 = vmatprep.subr.mxu0 0.0
    %1612 = vmatpush2.msra.mxu0 0.0
    %1613 = vmatprep.subr.mxu0 0.0
    %1614 = vmatpush2.msra.mxu0 0.0
    %1615 = vmatprep.subr.mxu0 0.0
    %1616 = vmatpush2.msra.mxu0 0.0
    %1617 = vmatprep.subr.mxu0 0.0
    %1618 = vmatpush2.msra.mxu0 0.0
    %1619 = vmatprep.subr.mxu0 0.0
    %1620 = vmatpush2.msra.mxu0 0.0
    %1621 = vmatprep.subr.mxu0 0.0
    %1622 = vmatpush2.msra.mxu0 0.0
    %1623 = vmatprep.subr.mxu0 0.0
    %1624 = vmatpush2.msra.mxu0 0.0
    %1625 = vmatprep.mubr.f32.mxu0 0.0
    %1626 = vmatmul.mubr.f32.gmra.mxu0 %v1558
    %v1627 = vpop.f32.mrf.mxu0
    %v1628 = vadd.f32 %v1560, %v1627
    %v1629 = vpop.f32.mrf.mxu0
    %1630 = vdwg.mxu0
    %v1631 = vtanh.pop %v1628
    %1632 = vst [vmem:[%s812] sm:$0xff] %v1631
    %s1633 = scalar_lea.vmem [#allocation16], 8
    %1634 = vst [vmem:[%s1633] sm:$0xff] %v1631
    %v1635 = vld [vmem:[#allocation2] sm:$0xff]
    %v1636 = vld [vmem:[#allocation2 + $0x8] sm:$0xff]
    %v1637 = vld [vmem:[#allocation2 + $0x10] sm:$0xff]
    %v1638 = vld [vmem:[#allocation2 + $0x18] sm:$0xff]
    %v1639 = vld [vmem:[#allocation2 + $0x20] sm:$0xff]
    %v1640 = vld [vmem:[#allocation2 + $0x28] sm:$0xff]
    %v1641 = vld [vmem:[#allocation2 + $0x30] sm:$0xff]
    %v1642 = vld [vmem:[#allocation2 + $0x38] sm:$0xff]
    %v1643 = vld [vmem:[#allocation14] sm:$0xff]
    %v1644 = vld [vmem:[#allocation14 + $0x8] sm:$0xff]
    %v1645 = vld [vmem:[#allocation14 + $0x10] sm:$0xff]
    %v1646 = vld [vmem:[#allocation14 + $0x18] sm:$0xff]
    %v1647 = vld [vmem:[#allocation14 + $0x20] sm:$0xff]
    %v1648 = vld [vmem:[#allocation14 + $0x28] sm:$0xff]
    %v1649 = vld [vmem:[#allocation14 + $0x30] sm:$0xff]
    %v1650 = vld [vmem:[#allocation14 + $0x38] sm:$0xff]
    %v1651 = vld [vmem:[#allocation14 + $0x40] sm:$0xff]
    %v1652 = vld [vmem:[#allocation14 + $0x48] sm:$0xff]
    %v1653 = vld [vmem:[#allocation14 + $0x50] sm:$0xff]
    %v1654 = vld [vmem:[#allocation14 + $0x58] sm:$0xff]
    %v1655 = vld [vmem:[#allocation14 + $0x60] sm:$0xff]
    %v1656 = vld [vmem:[#allocation14 + $0x68] sm:$0xff]
    %v1657 = vld [vmem:[#allocation14 + $0x70] sm:$0xff]
    %v1658 = vld [vmem:[#allocation14 + $0x78] sm:$0xff]
    %v1659 = vld [vmem:[%s9] sm:$0x1]
    %v1661 = vlaneseq
    %v1662 = vshrl.u32 %v1661, 7
    %v1663 = vsub.s32 0, %v1662
    %v1664 = vrot.slane %v1659, %v1663
    %1666 = vmatprep.subr.mxu0 0.0
    %1667 = vmatpush1.msra.mxu0 %v1658
    %1668 = vmatprep.subr.mxu0 0.0
    %1669 = vmatpush1.msra.mxu0 %v1657
    %1670 = vmatprep.subr.mxu0 0.0
    %1671 = vmatpush1.msra.mxu0 %v1656
    %1672 = vmatprep.subr.mxu0 0.0
    %1673 = vmatpush1.msra.mxu0 %v1655
    %1674 = vmatprep.subr.mxu0 0.0
    %1675 = vmatpush1.msra.mxu0 %v1654
    %1676 = vmatprep.subr.mxu0 0.0
    %1677 = vmatpush1.msra.mxu0 %v1653
    %1678 = vmatprep.subr.mxu0 0.0
    %1679 = vmatpush1.msra.mxu0 %v1652
    %1680 = vmatprep.subr.mxu0 0.0
    %1681 = vmatpush1.msra.mxu0 %v1651
    %1682 = vmatprep.subr.mxu0 0.0
    %1683 = vmatpush1.msra.mxu0 %v1650
    %1684 = vmatprep.subr.mxu0 0.0
    %1685 = vmatpush1.msra.mxu0 %v1649
    %1686 = vmatprep.subr.mxu0 0.0
    %1687 = vmatpush1.msra.mxu0 %v1648
    %1688 = vmatprep.subr.mxu0 0.0
    %1689 = vmatpush1.msra.mxu0 %v1647
    %1690 = vmatprep.subr.mxu0 0.0
    %1691 = vmatpush1.msra.mxu0 %v1646
    %1692 = vmatprep.subr.mxu0 0.0
    %1693 = vmatpush1.msra.mxu0 %v1645
    %1694 = vmatprep.subr.mxu0 0.0
    %1695 = vmatpush1.msra.mxu0 %v1644
    %1696 = vmatprep.subr.mxu0 0.0
    %1697 = vmatpush1.msra.mxu0 %v1643
    %1698 = vmatprep.subr.mxu0 0.0
    %1699 = vmatpush2.msra.mxu0 0.0
    %1700 = vmatprep.subr.mxu0 0.0
    %1701 = vmatpush2.msra.mxu0 0.0
    %1702 = vmatprep.subr.mxu0 0.0
    %1703 = vmatpush2.msra.mxu0 0.0
    %1704 = vmatprep.subr.mxu0 0.0
    %1705 = vmatpush2.msra.mxu0 0.0
    %1706 = vmatprep.subr.mxu0 0.0
    %1707 = vmatpush2.msra.mxu0 0.0
    %1708 = vmatprep.subr.mxu0 0.0
    %1709 = vmatpush2.msra.mxu0 0.0
    %1710 = vmatprep.subr.mxu0 0.0
    %1711 = vmatpush2.msra.mxu0 0.0
    %1712 = vmatprep.subr.mxu0 0.0
    %1713 = vmatpush2.msra.mxu0 0.0
    %1714 = vmatprep.subr.mxu0 0.0
    %1715 = vmatpush2.msra.mxu0 0.0
    %1716 = vmatprep.subr.mxu0 0.0
    %1717 = vmatpush2.msra.mxu0 0.0
    %1718 = vmatprep.subr.mxu0 0.0
    %1719 = vmatpush2.msra.mxu0 0.0
    %1720 = vmatprep.subr.mxu0 0.0
    %1721 = vmatpush2.msra.mxu0 0.0
    %1722 = vmatprep.subr.mxu0 0.0
    %1723 = vmatpush2.msra.mxu0 0.0
    %1724 = vmatprep.subr.mxu0 0.0
    %1725 = vmatpush2.msra.mxu0 0.0
    %1726 = vmatprep.subr.mxu0 0.0
    %1727 = vmatpush2.msra.mxu0 0.0
    %1728 = vmatprep.subr.mxu0 0.0
    %1729 = vmatpush2.msra.mxu0 0.0
    %1730 = vmatprep.mubr.f32.mxu0 0.0
    %1731 = vmatmul.mubr.f32.gmra.mxu0 %v1635
    %v1732 = vpop.f32.mrf.mxu0
    %v1733 = vadd.f32 %v1664, %v1732
    %v1734 = vpop.f32.mrf.mxu0
    %1735 = vmatprep.mubr.f32.mxu0 0.0
    %1736 = vmatmul.mubr.f32.gmra.mxu0 %v1636
    %v1737 = vpop.f32.mrf.mxu0
    %v1738 = vadd.f32 %v1664, %v1737
    %v1739 = vpop.f32.mrf.mxu0
    %1740 = vmatprep.mubr.f32.mxu0 0.0
    %1741 = vmatmul.mubr.f32.gmra.mxu0 %v1637
    %v1742 = vpop.f32.mrf.mxu0
    %v1743 = vadd.f32 %v1664, %v1742
    %v1744 = vpop.f32.mrf.mxu0
    %1745 = vmatprep.mubr.f32.mxu0 0.0
    %1746 = vmatmul.mubr.f32.gmra.mxu0 %v1638
    %v1747 = vpop.f32.mrf.mxu0
    %v1748 = vadd.f32 %v1664, %v1747
    %v1749 = vpop.f32.mrf.mxu0
    %1750 = vmatprep.mubr.f32.mxu0 0.0
    %1751 = vmatmul.mubr.f32.gmra.mxu0 %v1639
    %v1752 = vpop.f32.mrf.mxu0
    %v1753 = vadd.f32 %v1664, %v1752
    %v1754 = vpop.f32.mrf.mxu0
    %1755 = vmatprep.mubr.f32.mxu0 0.0
    %1756 = vmatmul.mubr.f32.gmra.mxu0 %v1640
    %v1757 = vpop.f32.mrf.mxu0
    %v1758 = vadd.f32 %v1664, %v1757
    %v1759 = vpop.f32.mrf.mxu0
    %1760 = vmatprep.mubr.f32.mxu0 0.0
    %1761 = vmatmul.mubr.f32.gmra.mxu0 %v1641
    %v1762 = vpop.f32.mrf.mxu0
    %v1763 = vadd.f32 %v1664, %v1762
    %v1764 = vpop.f32.mrf.mxu0
    %1765 = vmatprep.mubr.f32.mxu0 0.0
    %1766 = vmatmul.mubr.f32.gmra.mxu0 %v1642
    %v1767 = vpop.f32.mrf.mxu0
    %v1768 = vadd.f32 %v1664, %v1767
    %v1769 = vpop.f32.mrf.mxu0
    %1770 = vdwg.mxu0
    %1771 = vst [vmem:[#allocation15] sm:$0xff] %v1733
    %1772 = vst [vmem:[#allocation15 + $0x8] sm:$0xff] %v1738
    %1773 = vst [vmem:[#allocation15 + $0x10] sm:$0xff] %v1743
    %1774 = vst [vmem:[#allocation15 + $0x18] sm:$0xff] %v1748
    %1775 = vst [vmem:[#allocation15 + $0x20] sm:$0xff] %v1753
    %1776 = vst [vmem:[#allocation15 + $0x28] sm:$0xff] %v1758
    %1777 = vst [vmem:[#allocation15 + $0x30] sm:$0xff] %v1763
    %1778 = vst [vmem:[#allocation15 + $0x38] sm:$0xff] %v1768
    // Predicated region
    $region70: #{tpu_custom_call.1} parent=1 // pred_check
      _
    $region71: #{tpu_custom_call.1} parent=1 // pred_check_branch
      %1780 = sbr.rel (0) target = $region73
    $region72: #{tpu_custom_call.1} parent=1 // pred_region
      %s1782 = ssub.s32 1024, 1024
      %1783 = vsyncadd [#allocation5], %s1782
      %s1784 = sshll.u32 [#allocation15], 4
      %s1785 = int_to_ptr.vmem [resolvable:$true] %s1784
      %1790 = dma.vmem_to_hbm [thread:$0]  %s1785, 1024, %s10, [#allocation5], 128, 128, 8
    $region73: #{tpu_custom_call.1} parent=1 // pred_fallthru
      _
    // Predicated region
    $region74: #{tpu_custom_call.1} parent=1 // pred_check
      _
    $region75: #{tpu_custom_call.1} parent=1 // pred_check_branch
      %1792 = sbr.rel (0) target = $region77
    $region76: #{tpu_custom_call.1} parent=1 // pred_region
      %s1794 = ssub.s32 256, 256
      %1795 = vsyncadd [#allocation17], %s1794
      %s1796 = sshll.u32 [#allocation16], 4
      %s1797 = int_to_ptr.vmem [resolvable:$true] %s1796
      %1802 = dma.vmem_to_hbm [thread:$0]  %s1797, 256, %s11, [#allocation17], 128, 128, 8
    $region77: #{tpu_custom_call.1} parent=1 // pred_fallthru
      _
    // Predicated region
    $region78: #{tpu_custom_call.1} parent=1 // pred_check
      _
    $region79: #{tpu_custom_call.1} parent=1 // pred_check_branch
      %1804 = sbr.rel (0) target = $region81
    $region80: #{tpu_custom_call.1} parent=1 // pred_region
      %1805 = dma.done [#allocation5], 1024
    $region81: #{tpu_custom_call.1} parent=1 // pred_fallthru
      _
    // Predicated region
    $region82: #{tpu_custom_call.1} parent=1 // pred_check
      _
    $region83: #{tpu_custom_call.1} parent=1 // pred_check_branch
      %1807 = sbr.rel (0) target = $region85
    $region84: #{tpu_custom_call.1} parent=1 // pred_region
      %1808 = dma.done [#allocation17], 256
    $region85: #{tpu_custom_call.1} parent=1 // pred_fallthru
      _
    %1809 = vsyncpa [#allocation4], 1
    %1810 = vsyncpa [#allocation7], 1
    %1811 = vsyncpa [#allocation10], 1
    %1812 = vsyncpa [#allocation13], 1
    %1813 = vsyncpa [#allocation5], 1
    %1814 = vsyncpa [#allocation17], 1

</llo_original>
